<compile_context>
chip_gen: v5e
topology: v5e:2x2
jax: 0.10.0
libtpu: 0.0.40
codegen_flags: <defaults>
</compile_context>

<pallas_src>
import functools
import math

import numpy as np
import jax
import jax.numpy as jnp
from jax.experimental import pallas as pl
from jax.experimental.pallas import tpu as pltpu

_LANE = 128       # lane width (last dim)
_SUBLANE = 8      # f32 sublane width
_BF16_SUBLANE = 16  # bf16 min sublane tile


def _round_up(x: int, m: int) -> int:
    return ((x + m - 1) // m) * m


def _gelu_tanh(x):
    # tanh-approximate GELU; tanh lowers to the EUP (free slot next to MXU work).
    c = math.sqrt(2.0 / math.pi)
    return 0.5 * x * (1.0 + jnp.tanh(c * (x + 0.044715 * x * x * x)))


def _choose_batch_tile(batch: int) -> int:
    """Batch tile: multiple of 16, capped at 256, >=2 grid steps when possible."""
    b16 = _round_up(batch, _BF16_SUBLANE)
    if b16 <= _BF16_SUBLANE:
        return b16
    # Split into at least two tiles (keeps both v7x TensorCores busy) while
    # capping the tile at 256 rows (one full MXU pass on v6e/v7x).
    half = _round_up((b16 + 1) // 2, _BF16_SUBLANE)
    return min(256, half)


# ---------------------------------------------------------------------------
# Fused Pallas kernel: encoder -> fused mu/logvar head + reparam -> decoder
# ---------------------------------------------------------------------------
def _vae_fused_kernel(*refs, num_enc: int, num_dec: int):
    idx = 0
    x_ref = refs[idx]; idx += 1
    enc_refs = refs[idx:idx + num_enc]; idx += num_enc
    whead_ref, bhead_ref, eps_ref = refs[idx:idx + 3]; idx += 3
    dec_refs = refs[idx:idx + num_dec]; idx += num_dec
    recon_ref, mu_ref, lv_ref, z_ref = refs[idx:idx + 4]

    # ---- encoder (Linear(bias=False) + GELU per layer) ----
    h = x_ref[...]                                   # bf16 streamed input
    for w_ref in enc_refs:
        y = jnp.dot(h, w_ref[...], preferred_element_type=jnp.float32)
        h = _gelu_tanh(y).astype(jnp.bfloat16)       # f32 GELU, bf16 for next dot

    # ---- fused mu/logvar head (single (TB, 2*Lp) matmul) + reparam ----
    head = jnp.dot(h, whead_ref[...], preferred_element_type=jnp.float32)
    head = head + bhead_ref[...]                     # (1, 2*Lp) broadcast
    lp = head.shape[1] // 2                          # lane-aligned split point
    mu = head[:, :lp]
    lv = head[:, lp:]
    z = mu + eps_ref[...] * jnp.exp(0.5 * lv)

    # ---- decoder ----
    d = z.astype(jnp.bfloat16)
    for i, w_ref in enumerate(dec_refs):
        y = jnp.dot(d, w_ref[...], preferred_element_type=jnp.float32)
        a = _gelu_tanh(y)
        d = a.astype(jnp.bfloat16) if i + 1 < num_dec else a

    recon_ref[...] = d.astype(recon_ref.dtype)
    mu_ref[...] = mu.astype(mu_ref.dtype)
    lv_ref[...] = lv.astype(lv_ref.dtype)
    z_ref[...] = z.astype(z_ref.dtype)


# ---------------------------------------------------------------------------
# Wrapper: padding + pallas_call with a batch grid
# ---------------------------------------------------------------------------
def vae_forward(padded, x, eps, *, input_size: int, latent_dim: int,
                vmem_limit_bytes: int = 48 * 1024 * 1024):
    enc_ws = padded["encoder"]
    dec_ws = padded["decoder"]
    w_head = padded["w_head"]
    b_head = padded["b_head"]
    P_in = enc_ws[0].shape[0]
    P_lat = w_head.shape[0]
    P_out = dec_ws[-1].shape[1]

    B = x.shape[0]
    TB = _choose_batch_tile(B)
    B_pad = _round_up(B, TB)
    grid = (B_pad // TB,)

    # Zero-pad activations/eps; zeros flow through the math exactly
    # (gelu(0)=0, zero weight/bias padding, eps pad 0 => z pad 0).
    # x is pre-cast to bf16: it is consumed by a bf16 MXU dot anyway and this
    # halves the only per-grid-step HBM->VMEM stream.
    x_p = jnp.zeros((B_pad, P_in), jnp.bfloat16).at[:B, :input_size].set(
        x.astype(jnp.bfloat16))
    eps_p = jnp.zeros((B_pad, P_lat), jnp.float32).at[:B, :latent_dim].set(eps)

    def batch_spec(cols):
        return pl.BlockSpec((TB, cols), lambda b: (b, 0))

    out_shape = (jax.ShapeDtypeStruct((B_pad, P_out), jnp.float32),
                 jax.ShapeDtypeStruct((B_pad, P_lat), jnp.float32),
                 jax.ShapeDtypeStruct((B_pad, P_lat), jnp.float32),
                 jax.ShapeDtypeStruct((B_pad, P_lat), jnp.float32))
    out_specs = (batch_spec(P_out), batch_spec(P_lat),
                 batch_spec(P_lat), batch_spec(P_lat))

    # Cost hint for XLA's scheduler (padded-dim matmul flops dominate).
    mm_kn = sum(int(w.shape[0]) * int(w.shape[1]) for w in enc_ws + dec_ws)
    mm_kn += int(w_head.shape[0]) * int(w_head.shape[1])
    flops = 2 * B_pad * mm_kn
    transcendentals = B_pad * (sum(int(w.shape[1]) for w in enc_ws + dec_ws) + P_lat)
    bytes_accessed = (
        int(x_p.size) * 2 + int(eps_p.size) * 4
        + sum(int(w.size) * 2 for w in enc_ws + dec_ws)
        + int(w_head.size) * 2 + int(b_head.size) * 4
        + B_pad * (P_out + 3 * P_lat) * 4)
    cost = pl.CostEstimate(flops=flops, transcendentals=transcendentals,
                           bytes_accessed=bytes_accessed)

    kernel = functools.partial(_vae_fused_kernel,
                               num_enc=len(enc_ws), num_dec=len(dec_ws))
    operands = (x_p, *enc_ws, w_head, b_head, eps_p, *dec_ws)

    def _call(single_buffer_weights: bool):
        def resident(shape):
            # Constant block index -> weight DMA'd once, resident across the
            # whole batch grid. Single-buffer it to halve resident VMEM.
            if single_buffer_weights:
                return pl.BlockSpec(shape, lambda b: (0, 0),
                                    pipeline_mode=pl.Buffered(1))
            return pl.BlockSpec(shape, lambda b: (0, 0))

        in_specs = [batch_spec(P_in)]
        in_specs += [resident(tuple(w.shape)) for w in enc_ws]
        in_specs += [resident(tuple(w_head.shape)),
                     resident(tuple(b_head.shape)),
                     batch_spec(P_lat)]
        in_specs += [resident(tuple(w.shape)) for w in dec_ws]

        return pl.pallas_call(
            kernel,
            grid=grid,
            in_specs=in_specs,
            out_specs=out_specs,
            out_shape=out_shape,
            compiler_params=pltpu.CompilerParams(
                dimension_semantics=("parallel",),
                vmem_limit_bytes=vmem_limit_bytes),
            cost_estimate=cost,
        )(*operands)

    try:
        recon_p, mu_p, lv_p, z_p = _call(True)
    except Exception:
        # Fallback if this build rejects pl.Buffered(1) on resident blocks.
        recon_p, mu_p, lv_p, z_p = _call(False)

    return (recon_p[:B, :input_size], mu_p[:B, :latent_dim],
            lv_p[:B, :latent_dim], z_p[:B, :latent_dim])


# ---------------------------------------------------------------------------
# Parameter setup (mirrors the PyTorch module) + padding to kernel layout
# ---------------------------------------------------------------------------
def make_layer_sizes(input_size: int, layers: int, latent_dim: int) -> np.ndarray:
    latent_power = np.floor(np.log2(latent_dim))
    input_power = np.ceil(np.log2(input_size))
    sizes = np.logspace(input_power + 2, latent_power, layers, base=2.0).astype(int)
    sizes[0] = input_size
    sizes[-1] = latent_dim
    return sizes


def _uniform(key, shape, fan_in):
    bound = 1.0 / math.sqrt(fan_in)
    return jax.random.uniform(key, shape, jnp.float32, minval=-bound, maxval=bound)


def init_vae_params(key, input_size: int, layers: int, latent_dim: int):
    sizes = make_layer_sizes(input_size, layers, latent_dim)
    params = {"encoder": [], "decoder": []}

    # Encoder: Linear(sizes[i] -> sizes[i+1], bias=False); weights stored [in, out].
    for i in range(len(sizes) - 1):
        key, k = jax.random.split(key)
        params["encoder"].append(
            _uniform(k, (int(sizes[i]), int(sizes[i + 1])), int(sizes[i])))

    # mu / logvar heads: Linear(latent_dim -> latent_dim) with bias.
    key, k1, k2, k3, k4 = jax.random.split(key, 5)
    params["w_mu"] = _uniform(k1, (latent_dim, latent_dim), latent_dim)
    params["b_mu"] = _uniform(k2, (1, latent_dim), latent_dim)
    params["w_lv"] = _uniform(k3, (latent_dim, latent_dim), latent_dim)
    params["b_lv"] = _uniform(k4, (1, latent_dim), latent_dim)

    # Decoder: reversed layer sizes.
    rsizes = sizes[::-1]
    for i in range(len(rsizes) - 1):
        key, k = jax.random.split(key)
        params["decoder"].append(
            _uniform(k, (int(rsizes[i]), int(rsizes[i + 1])), int(rsizes[i])))
    return params


def _pad2(a, rows, cols, dtype):
    out = jnp.zeros((rows, cols), dtype)
    return out.at[:a.shape[0], :a.shape[1]].set(a.astype(dtype))


def pad_params_for_kernel(params):
    """Zero-pad feature dims to 128-lane multiples; weights -> bf16; fuse heads."""
    padded = {"encoder": [], "decoder": []}
    for w in params["encoder"]:
        padded["encoder"].append(
            _pad2(w, _round_up(w.shape[0], _LANE), _round_up(w.shape[1], _LANE),
                  jnp.bfloat16))
    for w in params["decoder"]:
        padded["decoder"].append(
            _pad2(w, _round_up(w.shape[0], _LANE), _round_up(w.shape[1], _LANE),
                  jnp.bfloat16))
    L = params["w_mu"].shape[0]
    Lp = _round_up(L, _LANE)
    w_mu = _pad2(params["w_mu"], Lp, Lp, jnp.bfloat16)
    w_lv = _pad2(params["w_lv"], Lp, Lp, jnp.bfloat16)
    b_mu = _pad2(params["b_mu"], 1, Lp, jnp.float32)
    b_lv = _pad2(params["b_lv"], 1, Lp, jnp.float32)
    # Fused head: one (Lp, 2*Lp) matmul instead of two (Lp, Lp) matmuls.
    padded["w_head"] = jnp.concatenate([w_mu, w_lv], axis=1)
    padded["b_head"] = jnp.concatenate([b_mu, b_lv], axis=1)
    return padded


if __name__ == "__main__":
    input_size, layers, latent_dim, batch = 16, 3, 8, 4

    key = jax.random.PRNGKey(0)
    key, kx, keps, kp = jax.random.split(key, 4)

    params = init_vae_params(kp, input_size, layers, latent_dim)
    padded = pad_params_for_kernel(params)

    x = jax.random.normal(kx, (batch, input_size), jnp.float32)
    eps = jax.random.normal(keps, (batch, latent_dim), jnp.float32)

    recon, mu, logvar, z = vae_forward(padded, x, eps,
                                       input_size=input_size,
                                       latent_dim=latent_dim)
    jax.block_until_ready((recon, mu, logvar, z))

    assert recon.shape == (batch, input_size)
    assert mu.shape == (batch, latent_dim)
    assert logvar.shape == (batch, latent_dim)
    assert z.shape == (batch, latent_dim)
    assert bool(jnp.all(jnp.isfinite(recon)))
    assert bool(jnp.all(jnp.isfinite(mu)))
    assert bool(jnp.all(jnp.isfinite(logvar)))
    assert bool(jnp.all(jnp.isfinite(z)))
    print("KERNEL_OK")
</pallas_src>

<mosaic_0001>
module attributes {stable_mosaic.version = 11 : i64} {
  func.func @_vae_fused_kernel(%arg0: i32, %arg1: memref<16x128xbf16, #tpu.memory_space<vmem>>, %arg2: memref<128x128xbf16, #tpu.memory_space<vmem>>, %arg3: memref<128x128xbf16, #tpu.memory_space<vmem>>, %arg4: memref<128x256xbf16, #tpu.memory_space<vmem>>, %arg5: memref<1x256xf32, #tpu.memory_space<vmem>>, %arg6: memref<16x128xf32, #tpu.memory_space<vmem>>, %arg7: memref<128x128xbf16, #tpu.memory_space<vmem>>, %arg8: memref<128x128xbf16, #tpu.memory_space<vmem>>, %arg9: memref<16x128xf32, #tpu.memory_space<vmem>>, %arg10: memref<16x128xf32, #tpu.memory_space<vmem>>, %arg11: memref<16x128xf32, #tpu.memory_space<vmem>>, %arg12: memref<16x128xf32, #tpu.memory_space<vmem>>) attributes {dimension_semantics = [#tpu.dimension_semantics<parallel>], iteration_bounds = array<i64: 1>, scalar_prefetch = 0 : i64, scratch_operands = 0 : i64, tpu.core_type = #tpu.core_type<tc>, window_params = [{transform_indices = @transform_0, window_bounds = array<i64: 16, 128>}, {pipeline_mode = #tpu.pipeline_mode<synchronous>, transform_indices = @transform_1, window_bounds = array<i64: 128, 128>}, {pipeline_mode = #tpu.pipeline_mode<synchronous>, transform_indices = @transform_2, window_bounds = array<i64: 128, 128>}, {pipeline_mode = #tpu.pipeline_mode<synchronous>, transform_indices = @transform_3, window_bounds = array<i64: 128, 256>}, {pipeline_mode = #tpu.pipeline_mode<synchronous>, transform_indices = @transform_4, window_bounds = array<i64: 1, 256>}, {transform_indices = @transform_5, window_bounds = array<i64: 16, 128>}, {pipeline_mode = #tpu.pipeline_mode<synchronous>, transform_indices = @transform_6, window_bounds = array<i64: 128, 128>}, {pipeline_mode = #tpu.pipeline_mode<synchronous>, transform_indices = @transform_7, window_bounds = array<i64: 128, 128>}, {transform_indices = @transform_8, window_bounds = array<i64: 16, 128>}, {transform_indices = @transform_9, window_bounds = array<i64: 16, 128>}, {transform_indices = @transform_10, window_bounds = array<i64: 16, 128>}, {transform_indices = @transform_11, window_bounds = array<i64: 16, 128>}]} {
    %c0 = arith.constant 0 : index
    %c0_0 = arith.constant 0 : index
    %0 = vector.load %arg1[%c0, %c0_0] : memref<16x128xbf16, #tpu.memory_space<vmem>>, vector<16x128xbf16>
    %c0_1 = arith.constant 0 : index
    %c0_2 = arith.constant 0 : index
    %1 = vector.load %arg2[%c0_1, %c0_2] : memref<128x128xbf16, #tpu.memory_space<vmem>>, vector<128x128xbf16>
    %cst = arith.constant dense<0.000000e+00> : vector<16x128xf32>
    %2 = tpu.matmul %0, %1, %cst {dimension_numbers = #tpu.dot_dimension_numbers<[1], [0], [0], [1], [0, 0, 1, 1], [], []>} : vector<16x128xbf16>, vector<128x128xbf16>, vector<16x128xf32> -> vector<16x128xf32>
    %cst_3 = arith.constant 5.000000e-01 : f32
    %3 = vector.broadcast %cst_3 : f32 to vector<16x128xf32>
    %4 = arith.mulf %3, %2 : vector<16x128xf32>
    %cst_4 = arith.constant 4.471500e-02 : f32
    %5 = vector.broadcast %cst_4 : f32 to vector<16x128xf32>
    %6 = arith.mulf %5, %2 : vector<16x128xf32>
    %7 = arith.mulf %6, %2 : vector<16x128xf32>
    %8 = arith.mulf %7, %2 : vector<16x128xf32>
    %9 = arith.addf %2, %8 : vector<16x128xf32>
    %cst_5 = arith.constant 0.797884583 : f32
    %10 = vector.broadcast %cst_5 : f32 to vector<16x128xf32>
    %11 = arith.mulf %10, %9 : vector<16x128xf32>
    %12 = math.tanh %11 : vector<16x128xf32>
    %cst_6 = arith.constant 1.000000e+00 : f32
    %13 = vector.broadcast %cst_6 : f32 to vector<16x128xf32>
    %14 = arith.addf %13, %12 : vector<16x128xf32>
    %15 = arith.mulf %4, %14 : vector<16x128xf32>
    %16 = arith.truncf %15 : vector<16x128xf32> to vector<16x128xbf16>
    %c0_7 = arith.constant 0 : index
    %c0_8 = arith.constant 0 : index
    %17 = vector.load %arg3[%c0_7, %c0_8] : memref<128x128xbf16, #tpu.memory_space<vmem>>, vector<128x128xbf16>
    %cst_9 = arith.constant dense<0.000000e+00> : vector<16x128xf32>
    %18 = tpu.matmul %16, %17, %cst_9 {dimension_numbers = #tpu.dot_dimension_numbers<[1], [0], [0], [1], [0, 0, 1, 1], [], []>} : vector<16x128xbf16>, vector<128x128xbf16>, vector<16x128xf32> -> vector<16x128xf32>
    %cst_10 = arith.constant 5.000000e-01 : f32
    %19 = vector.broadcast %cst_10 : f32 to vector<16x128xf32>
    %20 = arith.mulf %19, %18 : vector<16x128xf32>
    %cst_11 = arith.constant 4.471500e-02 : f32
    %21 = vector.broadcast %cst_11 : f32 to vector<16x128xf32>
    %22 = arith.mulf %21, %18 : vector<16x128xf32>
    %23 = arith.mulf %22, %18 : vector<16x128xf32>
    %24 = arith.mulf %23, %18 : vector<16x128xf32>
    %25 = arith.addf %18, %24 : vector<16x128xf32>
    %cst_12 = arith.constant 0.797884583 : f32
    %26 = vector.broadcast %cst_12 : f32 to vector<16x128xf32>
    %27 = arith.mulf %26, %25 : vector<16x128xf32>
    %28 = math.tanh %27 : vector<16x128xf32>
    %cst_13 = arith.constant 1.000000e+00 : f32
    %29 = vector.broadcast %cst_13 : f32 to vector<16x128xf32>
    %30 = arith.addf %29, %28 : vector<16x128xf32>
    %31 = arith.mulf %20, %30 : vector<16x128xf32>
    %32 = arith.truncf %31 : vector<16x128xf32> to vector<16x128xbf16>
    %c0_14 = arith.constant 0 : index
    %c0_15 = arith.constant 0 : index
    %33 = vector.load %arg4[%c0_14, %c0_15] : memref<128x256xbf16, #tpu.memory_space<vmem>>, vector<128x256xbf16>
    %cst_16 = arith.constant dense<0.000000e+00> : vector<16x256xf32>
    %34 = tpu.matmul %32, %33, %cst_16 {dimension_numbers = #tpu.dot_dimension_numbers<[1], [0], [0], [1], [0, 0, 1, 1], [], []>} : vector<16x128xbf16>, vector<128x256xbf16>, vector<16x256xf32> -> vector<16x256xf32>
    %c0_17 = arith.constant 0 : index
    %c0_18 = arith.constant 0 : index
    %35 = vector.load %arg5[%c0_17, %c0_18] : memref<1x256xf32, #tpu.memory_space<vmem>>, vector<1x256xf32>
    %36 = vector.broadcast %35 : vector<1x256xf32> to vector<16x256xf32>
    %37 = arith.addf %34, %36 : vector<16x256xf32>
    %38 = vector.extract_strided_slice %37 {offsets = [0, 0], sizes = [16, 128], strides = [1, 1]} : vector<16x256xf32> to vector<16x128xf32>
    %39 = vector.extract_strided_slice %37 {offsets = [0, 128], sizes = [16, 128], strides = [1, 1]} : vector<16x256xf32> to vector<16x128xf32>
    %c0_19 = arith.constant 0 : index
    %c0_20 = arith.constant 0 : index
    %40 = vector.load %arg6[%c0_19, %c0_20] : memref<16x128xf32, #tpu.memory_space<vmem>>, vector<16x128xf32>
    %cst_21 = arith.constant 5.000000e-01 : f32
    %41 = vector.broadcast %cst_21 : f32 to vector<16x128xf32>
    %42 = arith.mulf %41, %39 : vector<16x128xf32>
    %43 = math.exp %42 : vector<16x128xf32>
    %44 = arith.mulf %40, %43 : vector<16x128xf32>
    %45 = arith.addf %38, %44 : vector<16x128xf32>
    %46 = arith.truncf %45 : vector<16x128xf32> to vector<16x128xbf16>
    %c0_22 = arith.constant 0 : index
    %c0_23 = arith.constant 0 : index
    %47 = vector.load %arg7[%c0_22, %c0_23] : memref<128x128xbf16, #tpu.memory_space<vmem>>, vector<128x128xbf16>
    %cst_24 = arith.constant dense<0.000000e+00> : vector<16x128xf32>
    %48 = tpu.matmul %46, %47, %cst_24 {dimension_numbers = #tpu.dot_dimension_numbers<[1], [0], [0], [1], [0, 0, 1, 1], [], []>} : vector<16x128xbf16>, vector<128x128xbf16>, vector<16x128xf32> -> vector<16x128xf32>
    %cst_25 = arith.constant 5.000000e-01 : f32
    %49 = vector.broadcast %cst_25 : f32 to vector<16x128xf32>
    %50 = arith.mulf %49, %48 : vector<16x128xf32>
    %cst_26 = arith.constant 4.471500e-02 : f32
    %51 = vector.broadcast %cst_26 : f32 to vector<16x128xf32>
    %52 = arith.mulf %51, %48 : vector<16x128xf32>
    %53 = arith.mulf %52, %48 : vector<16x128xf32>
    %54 = arith.mulf %53, %48 : vector<16x128xf32>
    %55 = arith.addf %48, %54 : vector<16x128xf32>
    %cst_27 = arith.constant 0.797884583 : f32
    %56 = vector.broadcast %cst_27 : f32 to vector<16x128xf32>
    %57 = arith.mulf %56, %55 : vector<16x128xf32>
    %58 = math.tanh %57 : vector<16x128xf32>
    %cst_28 = arith.constant 1.000000e+00 : f32
    %59 = vector.broadcast %cst_28 : f32 to vector<16x128xf32>
    %60 = arith.addf %59, %58 : vector<16x128xf32>
    %61 = arith.mulf %50, %60 : vector<16x128xf32>
    %62 = arith.truncf %61 : vector<16x128xf32> to vector<16x128xbf16>
    %c0_29 = arith.constant 0 : index
    %c0_30 = arith.constant 0 : index
    %63 = vector.load %arg8[%c0_29, %c0_30] : memref<128x128xbf16, #tpu.memory_space<vmem>>, vector<128x128xbf16>
    %cst_31 = arith.constant dense<0.000000e+00> : vector<16x128xf32>
    %64 = tpu.matmul %62, %63, %cst_31 {dimension_numbers = #tpu.dot_dimension_numbers<[1], [0], [0], [1], [0, 0, 1, 1], [], []>} : vector<16x128xbf16>, vector<128x128xbf16>, vector<16x128xf32> -> vector<16x128xf32>
    %cst_32 = arith.constant 5.000000e-01 : f32
    %65 = vector.broadcast %cst_32 : f32 to vector<16x128xf32>
    %66 = arith.mulf %65, %64 : vector<16x128xf32>
    %cst_33 = arith.constant 4.471500e-02 : f32
    %67 = vector.broadcast %cst_33 : f32 to vector<16x128xf32>
    %68 = arith.mulf %67, %64 : vector<16x128xf32>
    %69 = arith.mulf %68, %64 : vector<16x128xf32>
    %70 = arith.mulf %69, %64 : vector<16x128xf32>
    %71 = arith.addf %64, %70 : vector<16x128xf32>
    %cst_34 = arith.constant 0.797884583 : f32
    %72 = vector.broadcast %cst_34 : f32 to vector<16x128xf32>
    %73 = arith.mulf %72, %71 : vector<16x128xf32>
    %74 = math.tanh %73 : vector<16x128xf32>
    %cst_35 = arith.constant 1.000000e+00 : f32
    %75 = vector.broadcast %cst_35 : f32 to vector<16x128xf32>
    %76 = arith.addf %75, %74 : vector<16x128xf32>
    %77 = arith.mulf %66, %76 : vector<16x128xf32>
    %c0_36 = arith.constant 0 : index
    %c0_37 = arith.constant 0 : index
    %78 = vector.load %arg9[%c0_36, %c0_37] : memref<16x128xf32, #tpu.memory_space<vmem>>, vector<16x128xf32>
    tpu.vector_store %arg9[%c0_36, %c0_37], %77 {strides = array<i32>} : memref<16x128xf32, #tpu.memory_space<vmem>>, vector<16x128xf32>,
    %c0_38 = arith.constant 0 : index
    %c0_39 = arith.constant 0 : index
    %79 = vector.load %arg10[%c0_38, %c0_39] : memref<16x128xf32, #tpu.memory_space<vmem>>, vector<16x128xf32>
    tpu.vector_store %arg10[%c0_38, %c0_39], %38 {strides = array<i32>} : memref<16x128xf32, #tpu.memory_space<vmem>>, vector<16x128xf32>,
    %c0_40 = arith.constant 0 : index
    %c0_41 = arith.constant 0 : index
    %80 = vector.load %arg11[%c0_40, %c0_41] : memref<16x128xf32, #tpu.memory_space<vmem>>, vector<16x128xf32>
    tpu.vector_store %arg11[%c0_40, %c0_41], %39 {strides = array<i32>} : memref<16x128xf32, #tpu.memory_space<vmem>>, vector<16x128xf32>,
    %c0_42 = arith.constant 0 : index
    %c0_43 = arith.constant 0 : index
    %81 = vector.load %arg12[%c0_42, %c0_43] : memref<16x128xf32, #tpu.memory_space<vmem>>, vector<16x128xf32>
    tpu.vector_store %arg12[%c0_42, %c0_43], %45 {strides = array<i32>} : memref<16x128xf32, #tpu.memory_space<vmem>>, vector<16x128xf32>,
    return
  }
  func.func @transform_0(%arg0: i32) -> (i32, i32) {
    %c0_i32 = arith.constant 0 : i32
    %c0_i32_0 = arith.constant 0 : i32
    return %arg0, %c0_i32 : i32, i32
  }
  func.func @transform_1(%arg0: i32) -> (i32, i32) {
    %c0_i32 = arith.constant 0 : i32
    %c0_i32_0 = arith.constant 0 : i32
    %c0_i32_1 = arith.constant 0 : i32
    return %c0_i32, %c0_i32_0 : i32, i32
  }
  func.func @transform_2(%arg0: i32) -> (i32, i32) {
    %c0_i32 = arith.constant 0 : i32
    %c0_i32_0 = arith.constant 0 : i32
    %c0_i32_1 = arith.constant 0 : i32
    return %c0_i32, %c0_i32_0 : i32, i32
  }
  func.func @transform_3(%arg0: i32) -> (i32, i32) {
    %c0_i32 = arith.constant 0 : i32
    %c0_i32_0 = arith.constant 0 : i32
    %c0_i32_1 = arith.constant 0 : i32
    return %c0_i32, %c0_i32_0 : i32, i32
  }
  func.func @transform_4(%arg0: i32) -> (i32, i32) {
    %c0_i32 = arith.constant 0 : i32
    %c0_i32_0 = arith.constant 0 : i32
    %c0_i32_1 = arith.constant 0 : i32
    return %c0_i32, %c0_i32_0 : i32, i32
  }
  func.func @transform_5(%arg0: i32) -> (i32, i32) {
    %c0_i32 = arith.constant 0 : i32
    %c0_i32_0 = arith.constant 0 : i32
    return %arg0, %c0_i32 : i32, i32
  }
  func.func @transform_6(%arg0: i32) -> (i32, i32) {
    %c0_i32 = arith.constant 0 : i32
    %c0_i32_0 = arith.constant 0 : i32
    %c0_i32_1 = arith.constant 0 : i32
    return %c0_i32, %c0_i32_0 : i32, i32
  }
  func.func @transform_7(%arg0: i32) -> (i32, i32) {
    %c0_i32 = arith.constant 0 : i32
    %c0_i32_0 = arith.constant 0 : i32
    %c0_i32_1 = arith.constant 0 : i32
    return %c0_i32, %c0_i32_0 : i32, i32
  }
  func.func @transform_8(%arg0: i32) -> (i32, i32) {
    %c0_i32 = arith.constant 0 : i32
    %c0_i32_0 = arith.constant 0 : i32
    return %arg0, %c0_i32 : i32, i32
  }
  func.func @transform_9(%arg0: i32) -> (i32, i32) {
    %c0_i32 = arith.constant 0 : i32
    %c0_i32_0 = arith.constant 0 : i32
    return %arg0, %c0_i32 : i32, i32
  }
  func.func @transform_10(%arg0: i32) -> (i32, i32) {
    %c0_i32 = arith.constant 0 : i32
    %c0_i32_0 = arith.constant 0 : i32
    return %arg0, %c0_i32 : i32, i32
  }
  func.func @transform_11(%arg0: i32) -> (i32, i32) {
    %c0_i32 = arith.constant 0 : i32
    %c0_i32_0 = arith.constant 0 : i32
    return %arg0, %c0_i32 : i32, i32
  }
}

module attributes {stable_mosaic.version = 11 : i64} {
  func.func @_vae_fused_kernel(%arg0: i32, %arg1: memref<16x128xbf16, #tpu.memory_space<vmem>>, %arg2: memref<128x128xbf16, #tpu.memory_space<vmem>>, %arg3: memref<128x128xbf16, #tpu.memory_space<vmem>>, %arg4: memref<128x256xbf16, #tpu.memory_space<vmem>>, %arg5: memref<1x256xf32, #tpu.memory_space<vmem>>, %arg6: memref<16x128xf32, #tpu.memory_space<vmem>>, %arg7: memref<128x128xbf16, #tpu.memory_space<vmem>>, %arg8: memref<128x128xbf16, #tpu.memory_space<vmem>>, %arg9: memref<16x128xf32, #tpu.memory_space<vmem>>, %arg10: memref<16x128xf32, #tpu.memory_space<vmem>>, %arg11: memref<16x128xf32, #tpu.memory_space<vmem>>, %arg12: memref<16x128xf32, #tpu.memory_space<vmem>>) attributes {dimension_semantics = [#tpu.dimension_semantics<parallel>], iteration_bounds = array<i64: 1>, scalar_prefetch = 0 : i64, scratch_operands = 0 : i64, tpu.core_type = #tpu.core_type<tc>, window_params = [{transform_indices = @transform_0, window_bounds = array<i64: 16, 128>}, {pipeline_mode = #tpu.pipeline_mode<synchronous>, transform_indices = @transform_1, window_bounds = array<i64: 128, 128>}, {pipeline_mode = #tpu.pipeline_mode<synchronous>, transform_indices = @transform_2, window_bounds = array<i64: 128, 128>}, {pipeline_mode = #tpu.pipeline_mode<synchronous>, transform_indices = @transform_3, window_bounds = array<i64: 128, 256>}, {pipeline_mode = #tpu.pipeline_mode<synchronous>, transform_indices = @transform_4, window_bounds = array<i64: 1, 256>}, {transform_indices = @transform_5, window_bounds = array<i64: 16, 128>}, {pipeline_mode = #tpu.pipeline_mode<synchronous>, transform_indices = @transform_6, window_bounds = array<i64: 128, 128>}, {pipeline_mode = #tpu.pipeline_mode<synchronous>, transform_indices = @transform_7, window_bounds = array<i64: 128, 128>}, {transform_indices = @transform_8, window_bounds = array<i64: 16, 128>}, {transform_indices = @transform_9, window_bounds = array<i64: 16, 128>}, {transform_indices = @transform_10, window_bounds = array<i64: 16, 128>}, {transform_indices = @transform_11, window_bounds = array<i64: 16, 128>}]} {
    %c0 = arith.constant 0 : index
    %c0_0 = arith.constant 0 : index
    %0 = vector.load %arg1[%c0, %c0_0] : memref<16x128xbf16, #tpu.memory_space<vmem>>, vector<16x128xbf16>
    %c0_1 = arith.constant 0 : index
    %c0_2 = arith.constant 0 : index
    %1 = vector.load %arg2[%c0_1, %c0_2] : memref<128x128xbf16, #tpu.memory_space<vmem>>, vector<128x128xbf16>
    %cst = arith.constant dense<0.000000e+00> : vector<16x128xf32>
    %2 = tpu.matmul %0, %1, %cst {dimension_numbers = #tpu.dot_dimension_numbers<[1], [0], [0], [1], [0, 0, 1, 1], [], []>} : vector<16x128xbf16>, vector<128x128xbf16>, vector<16x128xf32> -> vector<16x128xf32>
    %cst_3 = arith.constant 5.000000e-01 : f32
    %3 = vector.broadcast %cst_3 : f32 to vector<16x128xf32>
    %4 = arith.mulf %3, %2 : vector<16x128xf32>
    %cst_4 = arith.constant 4.471500e-02 : f32
    %5 = vector.broadcast %cst_4 : f32 to vector<16x128xf32>
    %6 = arith.mulf %5, %2 : vector<16x128xf32>
    %7 = arith.mulf %6, %2 : vector<16x128xf32>
    %8 = arith.mulf %7, %2 : vector<16x128xf32>
    %9 = arith.addf %2, %8 : vector<16x128xf32>
    %cst_5 = arith.constant 0.797884583 : f32
    %10 = vector.broadcast %cst_5 : f32 to vector<16x128xf32>
    %11 = arith.mulf %10, %9 : vector<16x128xf32>
    %12 = math.tanh %11 : vector<16x128xf32>
    %cst_6 = arith.constant 1.000000e+00 : f32
    %13 = vector.broadcast %cst_6 : f32 to vector<16x128xf32>
    %14 = arith.addf %13, %12 : vector<16x128xf32>
    %15 = arith.mulf %4, %14 : vector<16x128xf32>
    %16 = arith.truncf %15 : vector<16x128xf32> to vector<16x128xbf16>
    %c0_7 = arith.constant 0 : index
    %c0_8 = arith.constant 0 : index
    %17 = vector.load %arg3[%c0_7, %c0_8] : memref<128x128xbf16, #tpu.memory_space<vmem>>, vector<128x128xbf16>
    %cst_9 = arith.constant dense<0.000000e+00> : vector<16x128xf32>
    %18 = tpu.matmul %16, %17, %cst_9 {dimension_numbers = #tpu.dot_dimension_numbers<[1], [0], [0], [1], [0, 0, 1, 1], [], []>} : vector<16x128xbf16>, vector<128x128xbf16>, vector<16x128xf32> -> vector<16x128xf32>
    %cst_10 = arith.constant 5.000000e-01 : f32
    %19 = vector.broadcast %cst_10 : f32 to vector<16x128xf32>
    %20 = arith.mulf %19, %18 : vector<16x128xf32>
    %cst_11 = arith.constant 4.471500e-02 : f32
    %21 = vector.broadcast %cst_11 : f32 to vector<16x128xf32>
    %22 = arith.mulf %21, %18 : vector<16x128xf32>
    %23 = arith.mulf %22, %18 : vector<16x128xf32>
    %24 = arith.mulf %23, %18 : vector<16x128xf32>
    %25 = arith.addf %18, %24 : vector<16x128xf32>
    %cst_12 = arith.constant 0.797884583 : f32
    %26 = vector.broadcast %cst_12 : f32 to vector<16x128xf32>
    %27 = arith.mulf %26, %25 : vector<16x128xf32>
    %28 = math.tanh %27 : vector<16x128xf32>
    %cst_13 = arith.constant 1.000000e+00 : f32
    %29 = vector.broadcast %cst_13 : f32 to vector<16x128xf32>
    %30 = arith.addf %29, %28 : vector<16x128xf32>
    %31 = arith.mulf %20, %30 : vector<16x128xf32>
    %32 = arith.truncf %31 : vector<16x128xf32> to vector<16x128xbf16>
    %c0_14 = arith.constant 0 : index
    %c0_15 = arith.constant 0 : index
    %33 = vector.load %arg4[%c0_14, %c0_15] : memref<128x256xbf16, #tpu.memory_space<vmem>>, vector<128x256xbf16>
    %cst_16 = arith.constant dense<0.000000e+00> : vector<16x256xf32>
    %34 = tpu.matmul %32, %33, %cst_16 {dimension_numbers = #tpu.dot_dimension_numbers<[1], [0], [0], [1], [0, 0, 1, 1], [], []>} : vector<16x128xbf16>, vector<128x256xbf16>, vector<16x256xf32> -> vector<16x256xf32>
    %c0_17 = arith.constant 0 : index
    %c0_18 = arith.constant 0 : index
    %35 = vector.load %arg5[%c0_17, %c0_18] : memref<1x256xf32, #tpu.memory_space<vmem>>, vector<1x256xf32>
    %36 = vector.broadcast %35 : vector<1x256xf32> to vector<16x256xf32>
    %37 = arith.addf %34, %36 : vector<16x256xf32>
    %38 = vector.extract_strided_slice %37 {offsets = [0, 0], sizes = [16, 128], strides = [1, 1]} : vector<16x256xf32> to vector<16x128xf32>
    %39 = vector.extract_strided_slice %37 {offsets = [0, 128], sizes = [16, 128], strides = [1, 1]} : vector<16x256xf32> to vector<16x128xf32>
    %c0_19 = arith.constant 0 : index
    %c0_20 = arith.constant 0 : index
    %40 = vector.load %arg6[%c0_19, %c0_20] : memref<16x128xf32, #tpu.memory_space<vmem>>, vector<16x128xf32>
    %cst_21 = arith.constant 5.000000e-01 : f32
    %41 = vector.broadcast %cst_21 : f32 to vector<16x128xf32>
    %42 = arith.mulf %41, %39 : vector<16x128xf32>
    %43 = math.exp %42 : vector<16x128xf32>
    %44 = arith.mulf %40, %43 : vector<16x128xf32>
    %45 = arith.addf %38, %44 : vector<16x128xf32>
    %46 = arith.truncf %45 : vector<16x128xf32> to vector<16x128xbf16>
    %c0_22 = arith.constant 0 : index
    %c0_23 = arith.constant 0 : index
    %47 = vector.load %arg7[%c0_22, %c0_23] : memref<128x128xbf16, #tpu.memory_space<vmem>>, vector<128x128xbf16>
    %cst_24 = arith.constant dense<0.000000e+00> : vector<16x128xf32>
    %48 = tpu.matmul %46, %47, %cst_24 {dimension_numbers = #tpu.dot_dimension_numbers<[1], [0], [0], [1], [0, 0, 1, 1], [], []>} : vector<16x128xbf16>, vector<128x128xbf16>, vector<16x128xf32> -> vector<16x128xf32>
    %cst_25 = arith.constant 5.000000e-01 : f32
    %49 = vector.broadcast %cst_25 : f32 to vector<16x128xf32>
    %50 = arith.mulf %49, %48 : vector<16x128xf32>
    %cst_26 = arith.constant 4.471500e-02 : f32
    %51 = vector.broadcast %cst_26 : f32 to vector<16x128xf32>
    %52 = arith.mulf %51, %48 : vector<16x128xf32>
    %53 = arith.mulf %52, %48 : vector<16x128xf32>
    %54 = arith.mulf %53, %48 : vector<16x128xf32>
    %55 = arith.addf %48, %54 : vector<16x128xf32>
    %cst_27 = arith.constant 0.797884583 : f32
    %56 = vector.broadcast %cst_27 : f32 to vector<16x128xf32>
    %57 = arith.mulf %56, %55 : vector<16x128xf32>
    %58 = math.tanh %57 : vector<16x128xf32>
    %cst_28 = arith.constant 1.000000e+00 : f32
    %59 = vector.broadcast %cst_28 : f32 to vector<16x128xf32>
    %60 = arith.addf %59, %58 : vector<16x128xf32>
    %61 = arith.mulf %50, %60 : vector<16x128xf32>
    %62 = arith.truncf %61 : vector<16x128xf32> to vector<16x128xbf16>
    %c0_29 = arith.constant 0 : index
    %c0_30 = arith.constant 0 : index
    %63 = vector.load %arg8[%c0_29, %c0_30] : memref<128x128xbf16, #tpu.memory_space<vmem>>, vector<128x128xbf16>
    %cst_31 = arith.constant dense<0.000000e+00> : vector<16x128xf32>
    %64 = tpu.matmul %62, %63, %cst_31 {dimension_numbers = #tpu.dot_dimension_numbers<[1], [0], [0], [1], [0, 0, 1, 1], [], []>} : vector<16x128xbf16>, vector<128x128xbf16>, vector<16x128xf32> -> vector<16x128xf32>
    %cst_32 = arith.constant 5.000000e-01 : f32
    %65 = vector.broadcast %cst_32 : f32 to vector<16x128xf32>
    %66 = arith.mulf %65, %64 : vector<16x128xf32>
    %cst_33 = arith.constant 4.471500e-02 : f32
    %67 = vector.broadcast %cst_33 : f32 to vector<16x128xf32>
    %68 = arith.mulf %67, %64 : vector<16x128xf32>
    %69 = arith.mulf %68, %64 : vector<16x128xf32>
    %70 = arith.mulf %69, %64 : vector<16x128xf32>
    %71 = arith.addf %64, %70 : vector<16x128xf32>
    %cst_34 = arith.constant 0.797884583 : f32
    %72 = vector.broadcast %cst_34 : f32 to vector<16x128xf32>
    %73 = arith.mulf %72, %71 : vector<16x128xf32>
    %74 = math.tanh %73 : vector<16x128xf32>
    %cst_35 = arith.constant 1.000000e+00 : f32
    %75 = vector.broadcast %cst_35 : f32 to vector<16x128xf32>
    %76 = arith.addf %75, %74 : vector<16x128xf32>
    %77 = arith.mulf %66, %76 : vector<16x128xf32>
    %c0_36 = arith.constant 0 : index
    %c0_37 = arith.constant 0 : index
    %78 = vector.load %arg9[%c0_36, %c0_37] : memref<16x128xf32, #tpu.memory_space<vmem>>, vector<16x128xf32>
    tpu.vector_store %arg9[%c0_36, %c0_37], %77 {strides = array<i32>} : memref<16x128xf32, #tpu.memory_space<vmem>>, vector<16x128xf32>,
    %c0_38 = arith.constant 0 : index
    %c0_39 = arith.constant 0 : index
    %79 = vector.load %arg10[%c0_38, %c0_39] : memref<16x128xf32, #tpu.memory_space<vmem>>, vector<16x128xf32>
    tpu.vector_store %arg10[%c0_38, %c0_39], %38 {strides = array<i32>} : memref<16x128xf32, #tpu.memory_space<vmem>>, vector<16x128xf32>,
    %c0_40 = arith.constant 0 : index
    %c0_41 = arith.constant 0 : index
    %80 = vector.load %arg11[%c0_40, %c0_41] : memref<16x128xf32, #tpu.memory_space<vmem>>, vector<16x128xf32>
    tpu.vector_store %arg11[%c0_40, %c0_41], %39 {strides = array<i32>} : memref<16x128xf32, #tpu.memory_space<vmem>>, vector<16x128xf32>,
    %c0_42 = arith.constant 0 : index
    %c0_43 = arith.constant 0 : index
    %81 = vector.load %arg12[%c0_42, %c0_43] : memref<16x128xf32, #tpu.memory_space<vmem>>, vector<16x128xf32>
    tpu.vector_store %arg12[%c0_42, %c0_43], %45 {strides = array<i32>} : memref<16x128xf32, #tpu.memory_space<vmem>>, vector<16x128xf32>,
    return
  }
  func.func @transform_0(%arg0: i32) -> (i32, i32) {
    %c0_i32 = arith.constant 0 : i32
    %c0_i32_0 = arith.constant 0 : i32
    return %arg0, %c0_i32 : i32, i32
  }
  func.func @transform_1(%arg0: i32) -> (i32, i32) {
    %c0_i32 = arith.constant 0 : i32
    %c0_i32_0 = arith.constant 0 : i32
    %c0_i32_1 = arith.constant 0 : i32
    return %c0_i32, %c0_i32_0 : i32, i32
  }
  func.func @transform_2(%arg0: i32) -> (i32, i32) {
    %c0_i32 = arith.constant 0 : i32
    %c0_i32_0 = arith.constant 0 : i32
    %c0_i32_1 = arith.constant 0 : i32
    return %c0_i32, %c0_i32_0 : i32, i32
  }
  func.func @transform_3(%arg0: i32) -> (i32, i32) {
    %c0_i32 = arith.constant 0 : i32
    %c0_i32_0 = arith.constant 0 : i32
    %c0_i32_1 = arith.constant 0 : i32
    return %c0_i32, %c0_i32_0 : i32, i32
  }
  func.func @transform_4(%arg0: i32) -> (i32, i32) {
    %c0_i32 = arith.constant 0 : i32
    %c0_i32_0 = arith.constant 0 : i32
    %c0_i32_1 = arith.constant 0 : i32
    return %c0_i32, %c0_i32_0 : i32, i32
  }
  func.func @transform_5(%arg0: i32) -> (i32, i32) {
    %c0_i32 = arith.constant 0 : i32
    %c0_i32_0 = arith.constant 0 : i32
    return %arg0, %c0_i32 : i32, i32
  }
  func.func @transform_6(%arg0: i32) -> (i32, i32) {
    %c0_i32 = arith.constant 0 : i32
    %c0_i32_0 = arith.constant 0 : i32
    %c0_i32_1 = arith.constant 0 : i32
    return %c0_i32, %c0_i32_0 : i32, i32
  }
  func.func @transform_7(%arg0: i32) -> (i32, i32) {
    %c0_i32 = arith.constant 0 : i32
    %c0_i32_0 = arith.constant 0 : i32
    %c0_i32_1 = arith.constant 0 : i32
    return %c0_i32, %c0_i32_0 : i32, i32
  }
  func.func @transform_8(%arg0: i32) -> (i32, i32) {
    %c0_i32 = arith.constant 0 : i32
    %c0_i32_0 = arith.constant 0 : i32
    return %arg0, %c0_i32 : i32, i32
  }
  func.func @transform_9(%arg0: i32) -> (i32, i32) {
    %c0_i32 = arith.constant 0 : i32
    %c0_i32_0 = arith.constant 0 : i32
    return %arg0, %c0_i32 : i32, i32
  }
  func.func @transform_10(%arg0: i32) -> (i32, i32) {
    %c0_i32 = arith.constant 0 : i32
    %c0_i32_0 = arith.constant 0 : i32
    return %arg0, %c0_i32 : i32, i32
  }
  func.func @transform_11(%arg0: i32) -> (i32, i32) {
    %c0_i32 = arith.constant 0 : i32
    %c0_i32_0 = arith.constant 0 : i32
    return %arg0, %c0_i32 : i32, i32
  }
}

</mosaic_0001>

<llo_original>
// kernel: tpu_custom_call.1
$region0: #{tpu_custom_call.1}
  #allocation0 [shape = 'u32[]', space=smem, size = 0x4, offset = 0x4, fixed_abs, tag = 'smem constant byte address 0x4 - core index']
  #allocation1 [shape = 'u32[72,128]{1,0:T(1,128)}', space=vmem, size = 0x9000, scoped, tag = 'internal scratch']
  %s0 = inlined_call_operand.hbm [shape: bf16[16,128], index: 0, kind: input, shape index: {}]
  %s1 = inlined_call_operand.hbm [shape: bf16[128,128], index: 1, kind: input, shape index: {}]
  %s2 = inlined_call_operand.hbm [shape: bf16[128,128], index: 2, kind: input, shape index: {}]
  %s3 = inlined_call_operand.hbm [shape: bf16[128,256], index: 3, kind: input, shape index: {}]
  %s4 = inlined_call_operand.vmem [shape: f32[1,256], index: 4, kind: input, shape index: {}]
  %s5 = inlined_call_operand.hbm [shape: f32[16,128], index: 5, kind: input, shape index: {}]
  %s6 = inlined_call_operand.hbm [shape: bf16[128,128], index: 6, kind: input, shape index: {}]
  %s7 = inlined_call_operand.hbm [shape: bf16[128,128], index: 7, kind: input, shape index: {}]
  %s8 = inlined_call_operand.hbm [shape: f32[16,128], index: 8, kind: output, shape index: {0}]
  %s9 = inlined_call_operand.hbm [shape: f32[16,128], index: 9, kind: output, shape index: {1}]
  %s10 = inlined_call_operand.hbm [shape: f32[16,128], index: 10, kind: output, shape index: {2}]
  %s11 = inlined_call_operand.hbm [shape: f32[16,128], index: 11, kind: output, shape index: {3}]
  %12 = xla_tuple %s8, %s9, %s10, %s11
  %s13 = sld [smem:[#allocation0]]
  $region94: #{tpu_custom_call.1} parent=0
    _
  %s15 = ssub.s32 1, %s13
  %s16 = scalar_select 0, %s15, %s13
  $region1: #{tpu_custom_call.1} parent=0
    #allocation2 [shape = 'u8[4096]{0}', space=vmem, size = 0x1000, scoped, tag = 'input window, operand 0, single buffered']
    #allocation3 [shape = 's32[1]{0}', space=sflag, size = 0x4, scoped, tag = 'scoped memory for tpu_custom_call.1']
    #allocation4 [shape = 's32[1]{0}', space=sflag, size = 0x4, scoped, tag = 'scoped memory for tpu_custom_call.1']
    #allocation5 [shape = 'u8[32768]{0}', space=vmem, size = 0x8000, scoped, tag = 'input window, operand 1, single buffered']
    #allocation6 [shape = 's32[1]{0}', space=sflag, size = 0x4, scoped, tag = 'scoped memory for tpu_custom_call.1']
    #allocation7 [shape = 'u8[32768]{0}', space=vmem, size = 0x8000, scoped, tag = 'input window, operand 2, single buffered']
    #allocation8 [shape = 'u8[65536]{0}', space=vmem, size = 0x10000, scoped, tag = 'input window, operand 3, single buffered']
    #allocation9 [shape = 's32[1]{0}', space=sflag, size = 0x4, scoped, tag = 'scoped memory for tpu_custom_call.1']
    #allocation10 [shape = 'u8[8192]{0}', space=vmem, size = 0x2000, scoped, tag = 'input window, operand 5, single buffered']
    #allocation11 [shape = 'u8[32768]{0}', space=vmem, size = 0x8000, scoped, tag = 'input window, operand 6, single buffered']
    #allocation12 [shape = 's32[1]{0}', space=sflag, size = 0x4, scoped, tag = 'scoped memory for tpu_custom_call.1']
    #allocation13 [shape = 'u8[32768]{0}', space=vmem, size = 0x8000, scoped, tag = 'input window, operand 7, single buffered']
    #allocation14 [shape = 'u8[8192]{0}', space=vmem, size = 0x2000, scoped, tag = 'output window, operand 0, single buffered']
    #allocation15 [shape = 'u8[8192]{0}', space=vmem, size = 0x2000, scoped, tag = 'output window, operand 1, single buffered']
    #allocation16 [shape = 's32[1]{0}', space=sflag, size = 0x4, scoped, tag = 'scoped memory for tpu_custom_call.1']
    #allocation17 [shape = 'u8[8192]{0}', space=vmem, size = 0x2000, scoped, tag = 'output window, operand 2, single buffered']
    #allocation18 [shape = 'u8[8192]{0}', space=vmem, size = 0x2000, scoped, tag = 'output window, operand 3, single buffered']
    #allocation19 [shape = 's32[1]{0}', space=sflag, size = 0x4, scoped, tag = 'scoped memory for tpu_custom_call.1']
    %17 = vsyncpa [#allocation3], 0
    %18 = vsyncpa [#allocation6], 0
    %19 = vsyncpa [#allocation9], 0
    %20 = vsyncpa [#allocation12], 0
    %21 = vsyncpa [#allocation4], 0
    %22 = vsyncpa [#allocation16], 0
    %23 = vsyncpa [#allocation19], 0
    // Predicated region
    $region2: #{tpu_custom_call.1} parent=1 // pred_check
      _
    $region3: #{tpu_custom_call.1} parent=1 // pred_check_branch
      %25 = sbr.rel (0) target = $region5
    $region4: #{tpu_custom_call.1} parent=1 // pred_region
      %27 = vsyncadd [#allocation3], 0
      %s28 = sshll.u32 %s0, 4
      %s29 = int_to_ptr.hbm [resolvable:$true] %s28
      %s30 = sshll.u32 [#allocation2], 4
      %s31 = int_to_ptr.vmem [resolvable:$true] %s30
      %36 = dma.hbm_to_vmem [thread:$0]  %s29, 128, %s31, [#allocation3], 64, 64, 4
    $region5: #{tpu_custom_call.1} parent=1 // pred_fallthru
      _
    // Predicated region
    $region6: #{tpu_custom_call.1} parent=1 // pred_check
      _
    $region7: #{tpu_custom_call.1} parent=1 // pred_check_branch
      %38 = sbr.rel (0) target = $region9
    $region8: #{tpu_custom_call.1} parent=1 // pred_region
      %40 = vsyncadd [#allocation6], 0
      %s41 = sshll.u32 %s1, 4
      %s42 = int_to_ptr.hbm [resolvable:$true] %s41
      %s43 = sshll.u32 [#allocation5], 4
      %s44 = int_to_ptr.vmem [resolvable:$true] %s43
      %49 = dma.hbm_to_vmem [thread:$0]  %s42, 1024, %s44, [#allocation6], 64, 64, 4
    $region9: #{tpu_custom_call.1} parent=1 // pred_fallthru
      _
    // Predicated region
    $region10: #{tpu_custom_call.1} parent=1 // pred_check
      _
    $region11: #{tpu_custom_call.1} parent=1 // pred_check_branch
      %51 = sbr.rel (0) target = $region13
    $region12: #{tpu_custom_call.1} parent=1 // pred_region
      %53 = vsyncadd [#allocation6], 0
      %s54 = sshll.u32 %s2, 4
      %s55 = int_to_ptr.hbm [resolvable:$true] %s54
      %s56 = sshll.u32 [#allocation7], 4
      %s57 = int_to_ptr.vmem [resolvable:$true] %s56
      %62 = dma.hbm_to_vmem [thread:$0]  %s55, 1024, %s57, [#allocation6], 64, 64, 4
    $region13: #{tpu_custom_call.1} parent=1 // pred_fallthru
      _
    // Predicated region
    $region14: #{tpu_custom_call.1} parent=1 // pred_check
      _
    $region15: #{tpu_custom_call.1} parent=1 // pred_check_branch
      %64 = sbr.rel (0) target = $region17
    $region16: #{tpu_custom_call.1} parent=1 // pred_region
      %66 = vsyncadd [#allocation9], 0
      %s67 = sshll.u32 %s3, 4
      %s68 = int_to_ptr.hbm [resolvable:$true] %s67
      %s69 = sshll.u32 [#allocation8], 4
      %s70 = int_to_ptr.vmem [resolvable:$true] %s69
      %75 = dma.hbm_to_vmem [thread:$0]  %s68, 2048, %s70, [#allocation9], 128, 128, 8
    $region17: #{tpu_custom_call.1} parent=1 // pred_fallthru
      _
    // Predicated region
    $region18: #{tpu_custom_call.1} parent=1 // pred_check
      _
    $region19: #{tpu_custom_call.1} parent=1 // pred_check_branch
      %77 = sbr.rel (0) target = $region21
    $region20: #{tpu_custom_call.1} parent=1 // pred_region
      _
    $region21: #{tpu_custom_call.1} parent=1 // pred_fallthru
      _
    // Predicated region
    $region22: #{tpu_custom_call.1} parent=1 // pred_check
      _
    $region23: #{tpu_custom_call.1} parent=1 // pred_check_branch
      %79 = sbr.rel (0) target = $region25
    $region24: #{tpu_custom_call.1} parent=1 // pred_region
      %81 = vsyncadd [#allocation9], 0
      %s82 = sshll.u32 %s5, 4
      %s83 = int_to_ptr.hbm [resolvable:$true] %s82
      %s84 = sshll.u32 [#allocation10], 4
      %s85 = int_to_ptr.vmem [resolvable:$true] %s84
      %90 = dma.hbm_to_vmem [thread:$0]  %s83, 256, %s85, [#allocation9], 128, 128, 8
    $region25: #{tpu_custom_call.1} parent=1 // pred_fallthru
      _
    // Predicated region
    $region26: #{tpu_custom_call.1} parent=1 // pred_check
      _
    $region27: #{tpu_custom_call.1} parent=1 // pred_check_branch
      %92 = sbr.rel (0) target = $region29
    $region28: #{tpu_custom_call.1} parent=1 // pred_region
      %94 = vsyncadd [#allocation12], 0
      %s95 = sshll.u32 %s6, 4
      %s96 = int_to_ptr.hbm [resolvable:$true] %s95
      %s97 = sshll.u32 [#allocation11], 4
      %s98 = int_to_ptr.vmem [resolvable:$true] %s97
      %103 = dma.hbm_to_vmem [thread:$0]  %s96, 1024, %s98, [#allocation12], 64, 64, 4
    $region29: #{tpu_custom_call.1} parent=1 // pred_fallthru
      _
    // Predicated region
    $region30: #{tpu_custom_call.1} parent=1 // pred_check
      _
    $region31: #{tpu_custom_call.1} parent=1 // pred_check_branch
      %105 = sbr.rel (0) target = $region33
    $region32: #{tpu_custom_call.1} parent=1 // pred_region
      %107 = vsyncadd [#allocation12], 0
      %s108 = sshll.u32 %s7, 4
      %s109 = int_to_ptr.hbm [resolvable:$true] %s108
      %s110 = sshll.u32 [#allocation13], 4
      %s111 = int_to_ptr.vmem [resolvable:$true] %s110
      %116 = dma.hbm_to_vmem [thread:$0]  %s109, 1024, %s111, [#allocation12], 64, 64, 4
    $region33: #{tpu_custom_call.1} parent=1 // pred_fallthru
      _
    // Predicated region
    $region34: #{tpu_custom_call.1} parent=1 // pred_check
      _
    $region35: #{tpu_custom_call.1} parent=1 // pred_check_branch
      %118 = sbr.rel (0) target = $region37
    $region36: #{tpu_custom_call.1} parent=1 // pred_region
      %120 = dma.done [#allocation3], 128
    $region37: #{tpu_custom_call.1} parent=1 // pred_fallthru
      _
    // Predicated region
    $region38: #{tpu_custom_call.1} parent=1 // pred_check
      _
    $region39: #{tpu_custom_call.1} parent=1 // pred_check_branch
      %122 = sbr.rel (0) target = $region41
    $region40: #{tpu_custom_call.1} parent=1 // pred_region
      %124 = dma.done [#allocation6], 1024
    $region41: #{tpu_custom_call.1} parent=1 // pred_fallthru
      _
    // Predicated region
    $region42: #{tpu_custom_call.1} parent=1 // pred_check
      _
    $region43: #{tpu_custom_call.1} parent=1 // pred_check_branch
      %126 = sbr.rel (0) target = $region45
    $region44: #{tpu_custom_call.1} parent=1 // pred_region
      %128 = dma.done [#allocation6], 1024
    $region45: #{tpu_custom_call.1} parent=1 // pred_fallthru
      _
    // Predicated region
    $region46: #{tpu_custom_call.1} parent=1 // pred_check
      _
    $region47: #{tpu_custom_call.1} parent=1 // pred_check_branch
      %130 = sbr.rel (0) target = $region49
    $region48: #{tpu_custom_call.1} parent=1 // pred_region
      %132 = dma.done [#allocation9], 2048
    $region49: #{tpu_custom_call.1} parent=1 // pred_fallthru
      _
    // Predicated region
    $region50: #{tpu_custom_call.1} parent=1 // pred_check
      _
    $region51: #{tpu_custom_call.1} parent=1 // pred_check_branch
      %134 = sbr.rel (0) target = $region53
    $region52: #{tpu_custom_call.1} parent=1 // pred_region
      %136 = dma.done [#allocation9], 256
    $region53: #{tpu_custom_call.1} parent=1 // pred_fallthru
      _
    // Predicated region
    $region54: #{tpu_custom_call.1} parent=1 // pred_check
      _
    $region55: #{tpu_custom_call.1} parent=1 // pred_check_branch
      %138 = sbr.rel (0) target = $region57
    $region56: #{tpu_custom_call.1} parent=1 // pred_region
      %140 = dma.done [#allocation12], 1024
    $region57: #{tpu_custom_call.1} parent=1 // pred_fallthru
      _
    // Predicated region
    $region58: #{tpu_custom_call.1} parent=1 // pred_check
      _
    $region59: #{tpu_custom_call.1} parent=1 // pred_check_branch
      %142 = sbr.rel (0) target = $region61
    $region60: #{tpu_custom_call.1} parent=1 // pred_region
      %144 = dma.done [#allocation12], 1024
    $region61: #{tpu_custom_call.1} parent=1 // pred_fallthru
      _
    %v145 = vld [vmem:[#allocation2] sm:$0xf]
    %v146 = vld [vmem:[#allocation2 + $0x4] sm:$0xf]
    %v147 = vld [vmem:[#allocation5] sm:$0xf]
    %v148 = vld [vmem:[#allocation5 + $0x4] sm:$0xf]
    %v149 = vld [vmem:[#allocation5 + $0x8] sm:$0xf]
    %v150 = vld [vmem:[#allocation5 + $0xc] sm:$0xf]
    %v151 = vld [vmem:[#allocation5 + $0x10] sm:$0xf]
    %v152 = vld [vmem:[#allocation5 + $0x14] sm:$0xf]
    %v153 = vld [vmem:[#allocation5 + $0x18] sm:$0xf]
    %v154 = vld [vmem:[#allocation5 + $0x1c] sm:$0xf]
    %v155 = vld [vmem:[#allocation5 + $0x20] sm:$0xf]
    %v156 = vld [vmem:[#allocation5 + $0x24] sm:$0xf]
    %v157 = vld [vmem:[#allocation5 + $0x28] sm:$0xf]
    %v158 = vld [vmem:[#allocation5 + $0x2c] sm:$0xf]
    %v159 = vld [vmem:[#allocation5 + $0x30] sm:$0xf]
    %v160 = vld [vmem:[#allocation5 + $0x34] sm:$0xf]
    %v161 = vld [vmem:[#allocation5 + $0x38] sm:$0xf]
    %v162 = vld [vmem:[#allocation5 + $0x3c] sm:$0xf]
    %v165 = vunpack.c.l.b16 %v145
    %v166 = vunpack.c.l.b16 %v146
    %v167 = vpack.c.b16 %v166, %v165
    %v185 = vunpack.c.l.b16 %v147
    %v186 = vunpack.c.l.b16 %v148
    %v187 = vunpack.c.l.b16 %v149
    %v188 = vunpack.c.l.b16 %v150
    %v189 = vunpack.c.l.b16 %v151
    %v190 = vunpack.c.l.b16 %v152
    %v191 = vunpack.c.l.b16 %v153
    %v192 = vunpack.c.l.b16 %v154
    %v193 = vunpack.c.l.b16 %v155
    %v194 = vunpack.c.l.b16 %v156
    %v195 = vunpack.c.l.b16 %v157
    %v196 = vunpack.c.l.b16 %v158
    %v197 = vunpack.c.l.b16 %v159
    %v198 = vunpack.c.l.b16 %v160
    %v199 = vunpack.c.l.b16 %v161
    %v200 = vunpack.c.l.b16 %v162
    %v201 = vpack.c.b16 %v186, %v185
    %v202 = vpack.c.b16 %v188, %v187
    %v203 = vpack.c.b16 %v190, %v189
    %v204 = vpack.c.b16 %v192, %v191
    %v205 = vpack.c.b16 %v194, %v193
    %v206 = vpack.c.b16 %v196, %v195
    %v207 = vpack.c.b16 %v198, %v197
    %v208 = vpack.c.b16 %v200, %v199
    %217 = vmatpush.bf16.msra.mxu0 %v208
    %218 = vmatpush.bf16.msra.mxu0 %v207
    %219 = vmatpush.bf16.msra.mxu0 %v206
    %220 = vmatpush.bf16.msra.mxu0 %v205
    %221 = vmatpush.bf16.msra.mxu0 %v204
    %222 = vmatpush.bf16.msra.mxu0 %v203
    %223 = vmatpush.bf16.msra.mxu0 %v202
    %224 = vmatpush.bf16.msra.mxu0 %v201
    %225 = vmatmul.bf16.gmra.mxu0 %v167
    %v226 = vpop.f32.mrf.mxu0
    %v227 = vadd.f32 0.0, %v226
    %v228 = vpop.f32.mrf.mxu0
    %v229 = vadd.f32 0.0, %v228
    %230 = vdwg.mxu0
    %v231 = vmul.f32 %v227, 0.5
    %v232 = vmul.f32 %v229, 0.5
    %v233 = vmul.f32 %v227, 0.044715
    %v234 = vmul.f32 %v229, 0.044715
    %v235 = vmul.f32 %v233, %v227
    %v236 = vmul.f32 %v234, %v229
    %v237 = vmul.f32 %v235, %v227
    %v238 = vmul.f32 %v236, %v229
    %v239 = vadd.f32 %v227, %v237
    %v240 = vadd.f32 %v229, %v238
    %v241 = vmul.f32 %v239, 0.7978846
    %v242 = vmul.f32 %v240, 0.7978846
    %v243 = vtanh.pop %v241
    %v244 = vtanh.pop %v242
    %v245 = vadd.f32 %v243, 1.0
    %v246 = vadd.f32 %v244, 1.0
    %v247 = vmul.f32 %v231, %v245
    %v248 = vmul.f32 %v232, %v246
    %v249 = vpack.c.bf16 %v248, %v247
    %v250 = vld [vmem:[#allocation7] sm:$0xf]
    %v251 = vld [vmem:[#allocation7 + $0x4] sm:$0xf]
    %v252 = vld [vmem:[#allocation7 + $0x8] sm:$0xf]
    %v253 = vld [vmem:[#allocation7 + $0xc] sm:$0xf]
    %v254 = vld [vmem:[#allocation7 + $0x10] sm:$0xf]
    %v255 = vld [vmem:[#allocation7 + $0x14] sm:$0xf]
    %v256 = vld [vmem:[#allocation7 + $0x18] sm:$0xf]
    %v257 = vld [vmem:[#allocation7 + $0x1c] sm:$0xf]
    %v258 = vld [vmem:[#allocation7 + $0x20] sm:$0xf]
    %v259 = vld [vmem:[#allocation7 + $0x24] sm:$0xf]
    %v260 = vld [vmem:[#allocation7 + $0x28] sm:$0xf]
    %v261 = vld [vmem:[#allocation7 + $0x2c] sm:$0xf]
    %v262 = vld [vmem:[#allocation7 + $0x30] sm:$0xf]
    %v263 = vld [vmem:[#allocation7 + $0x34] sm:$0xf]
    %v264 = vld [vmem:[#allocation7 + $0x38] sm:$0xf]
    %v265 = vld [vmem:[#allocation7 + $0x3c] sm:$0xf]
    %v282 = vunpack.c.l.b16 %v250
    %v283 = vunpack.c.l.b16 %v251
    %v284 = vunpack.c.l.b16 %v252
    %v285 = vunpack.c.l.b16 %v253
    %v286 = vunpack.c.l.b16 %v254
    %v287 = vunpack.c.l.b16 %v255
    %v288 = vunpack.c.l.b16 %v256
    %v289 = vunpack.c.l.b16 %v257
    %v290 = vunpack.c.l.b16 %v258
    %v291 = vunpack.c.l.b16 %v259
    %v292 = vunpack.c.l.b16 %v260
    %v293 = vunpack.c.l.b16 %v261
    %v294 = vunpack.c.l.b16 %v262
    %v295 = vunpack.c.l.b16 %v263
    %v296 = vunpack.c.l.b16 %v264
    %v297 = vunpack.c.l.b16 %v265
    %v298 = vpack.c.b16 %v283, %v282
    %v299 = vpack.c.b16 %v285, %v284
    %v300 = vpack.c.b16 %v287, %v286
    %v301 = vpack.c.b16 %v289, %v288
    %v302 = vpack.c.b16 %v291, %v290
    %v303 = vpack.c.b16 %v293, %v292
    %v304 = vpack.c.b16 %v295, %v294
    %v305 = vpack.c.b16 %v297, %v296
    %314 = vmatpush.bf16.msra.mxu0 %v305
    %315 = vmatpush.bf16.msra.mxu0 %v304
    %316 = vmatpush.bf16.msra.mxu0 %v303
    %317 = vmatpush.bf16.msra.mxu0 %v302
    %318 = vmatpush.bf16.msra.mxu0 %v301
    %319 = vmatpush.bf16.msra.mxu0 %v300
    %320 = vmatpush.bf16.msra.mxu0 %v299
    %321 = vmatpush.bf16.msra.mxu0 %v298
    %322 = vmatmul.bf16.gmra.mxu0 %v249
    %v323 = vpop.f32.mrf.mxu0
    %v324 = vadd.f32 0.0, %v323
    %v325 = vpop.f32.mrf.mxu0
    %v326 = vadd.f32 0.0, %v325
    %327 = vdwg.mxu0
    %v328 = vmul.f32 %v324, 0.5
    %v329 = vmul.f32 %v326, 0.5
    %v330 = vmul.f32 %v324, 0.044715
    %v331 = vmul.f32 %v326, 0.044715
    %v332 = vmul.f32 %v330, %v324
    %v333 = vmul.f32 %v331, %v326
    %v334 = vmul.f32 %v332, %v324
    %v335 = vmul.f32 %v333, %v326
    %v336 = vadd.f32 %v324, %v334
    %v337 = vadd.f32 %v326, %v335
    %v338 = vmul.f32 %v336, 0.7978846
    %v339 = vmul.f32 %v337, 0.7978846
    %v340 = vtanh.pop %v338
    %v341 = vtanh.pop %v339
    %v342 = vadd.f32 %v340, 1.0
    %v343 = vadd.f32 %v341, 1.0
    %v344 = vmul.f32 %v328, %v342
    %v345 = vmul.f32 %v329, %v343
    %v346 = vpack.c.bf16 %v345, %v344
    %v347 = vld [vmem:[#allocation8] sm:$0xff]
    %v348 = vld [vmem:[#allocation8 + $0x8] sm:$0xff]
    %v349 = vld [vmem:[#allocation8 + $0x10] sm:$0xff]
    %v350 = vld [vmem:[#allocation8 + $0x18] sm:$0xff]
    %v351 = vld [vmem:[#allocation8 + $0x20] sm:$0xff]
    %v352 = vld [vmem:[#allocation8 + $0x28] sm:$0xff]
    %v353 = vld [vmem:[#allocation8 + $0x30] sm:$0xff]
    %v354 = vld [vmem:[#allocation8 + $0x38] sm:$0xff]
    %v355 = vld [vmem:[#allocation8 + $0x40] sm:$0xff]
    %v356 = vld [vmem:[#allocation8 + $0x48] sm:$0xff]
    %v357 = vld [vmem:[#allocation8 + $0x50] sm:$0xff]
    %v358 = vld [vmem:[#allocation8 + $0x58] sm:$0xff]
    %v359 = vld [vmem:[#allocation8 + $0x60] sm:$0xff]
    %v360 = vld [vmem:[#allocation8 + $0x68] sm:$0xff]
    %v361 = vld [vmem:[#allocation8 + $0x70] sm:$0xff]
    %v362 = vld [vmem:[#allocation8 + $0x78] sm:$0xff]
    %v363 = vld [vmem:[%s4] sm:$0x3]
    %v365 = vperm.slane %v363, 0
    %v366 = vperm.slane %v363, 1
    %v385 = vunpack.c.l.b16 %v347
    %v386 = vunpack.c.h.b16 %v347
    %v387 = vunpack.c.l.b16 %v348
    %v388 = vunpack.c.h.b16 %v348
    %v389 = vunpack.c.l.b16 %v349
    %v390 = vunpack.c.h.b16 %v349
    %v391 = vunpack.c.l.b16 %v350
    %v392 = vunpack.c.h.b16 %v350
    %v393 = vunpack.c.l.b16 %v351
    %v394 = vunpack.c.h.b16 %v351
    %v395 = vunpack.c.l.b16 %v352
    %v396 = vunpack.c.h.b16 %v352
    %v397 = vunpack.c.l.b16 %v353
    %v398 = vunpack.c.h.b16 %v353
    %v399 = vunpack.c.l.b16 %v354
    %v400 = vunpack.c.h.b16 %v354
    %v401 = vunpack.c.l.b16 %v355
    %v402 = vunpack.c.h.b16 %v355
    %v403 = vunpack.c.l.b16 %v356
    %v404 = vunpack.c.h.b16 %v356
    %v405 = vunpack.c.l.b16 %v357
    %v406 = vunpack.c.h.b16 %v357
    %v407 = vunpack.c.l.b16 %v358
    %v408 = vunpack.c.h.b16 %v358
    %v409 = vunpack.c.l.b16 %v359
    %v410 = vunpack.c.h.b16 %v359
    %v411 = vunpack.c.l.b16 %v360
    %v412 = vunpack.c.h.b16 %v360
    %v413 = vunpack.c.l.b16 %v361
    %v414 = vunpack.c.h.b16 %v361
    %v415 = vunpack.c.l.b16 %v362
    %v416 = vunpack.c.h.b16 %v362
    %v417 = vpack.c.b16 %v387, %v385
    %v418 = vpack.c.b16 %v388, %v386
    %v419 = vpack.c.b16 %v391, %v389
    %v420 = vpack.c.b16 %v392, %v390
    %v421 = vpack.c.b16 %v395, %v393
    %v422 = vpack.c.b16 %v396, %v394
    %v423 = vpack.c.b16 %v399, %v397
    %v424 = vpack.c.b16 %v400, %v398
    %v425 = vpack.c.b16 %v403, %v401
    %v426 = vpack.c.b16 %v404, %v402
    %v427 = vpack.c.b16 %v407, %v405
    %v428 = vpack.c.b16 %v408, %v406
    %v429 = vpack.c.b16 %v411, %v409
    %v430 = vpack.c.b16 %v412, %v410
    %v431 = vpack.c.b16 %v415, %v413
    %v432 = vpack.c.b16 %v416, %v414
    %449 = vmatpush.bf16.msra.mxu0 %v431
    %450 = vmatpush.bf16.msra.mxu0 %v429
    %451 = vmatpush.bf16.msra.mxu0 %v427
    %452 = vmatpush.bf16.msra.mxu0 %v425
    %453 = vmatpush.bf16.msra.mxu0 %v423
    %454 = vmatpush.bf16.msra.mxu0 %v421
    %455 = vmatpush.bf16.msra.mxu0 %v419
    %456 = vmatpush.bf16.msra.mxu0 %v417
    %457 = vmatmul.bf16.gmra.mxu0 %v346
    %v458 = vpop.f32.mrf.mxu0
    %v459 = vadd.f32 %v365, %v458
    %v460 = vpop.f32.mrf.mxu0
    %v461 = vadd.f32 %v365, %v460
    %462 = vdwg.mxu0
    %463 = vmatpush.bf16.msra.mxu0 %v432
    %464 = vmatpush.bf16.msra.mxu0 %v430
    %465 = vmatpush.bf16.msra.mxu0 %v428
    %466 = vmatpush.bf16.msra.mxu0 %v426
    %467 = vmatpush.bf16.msra.mxu0 %v424
    %468 = vmatpush.bf16.msra.mxu0 %v422
    %469 = vmatpush.bf16.msra.mxu0 %v420
    %470 = vmatpush.bf16.msra.mxu0 %v418
    %471 = vmatmul.bf16.gmra.mxu0 %v346
    %v472 = vpop.f32.mrf.mxu0
    %v473 = vadd.f32 %v366, %v472
    %v474 = vpop.f32.mrf.mxu0
    %v475 = vadd.f32 %v366, %v474
    %476 = vdwg.mxu0
    %v477 = vld [vmem:[#allocation10] sm:$0xff]
    %v478 = vld [vmem:[#allocation10 + $0x8] sm:$0xff]
    %v479 = vmul.f32 %v473, 0.5
    %v480 = vmul.f32 %v475, 0.5
    %v481 = vmul.f32 %v479, 1.442695
    %v482 = vpow.pop %v481
    %v483 = vmul.f32 %v480, 1.442695
    %v484 = vpow.pop %v483
    %v485 = vmul.f32 %v477, %v482
    %v486 = vmul.f32 %v478, %v484
    %v487 = vadd.f32 %v459, %v485
    %v488 = vadd.f32 %v461, %v486
    %v489 = vpack.c.bf16 %v488, %v487
    %v490 = vld [vmem:[#allocation11] sm:$0xf]
    %v491 = vld [vmem:[#allocation11 + $0x4] sm:$0xf]
    %v492 = vld [vmem:[#allocation11 + $0x8] sm:$0xf]
    %v493 = vld [vmem:[#allocation11 + $0xc] sm:$0xf]
    %v494 = vld [vmem:[#allocation11 + $0x10] sm:$0xf]
    %v495 = vld [vmem:[#allocation11 + $0x14] sm:$0xf]
    %v496 = vld [vmem:[#allocation11 + $0x18] sm:$0xf]
    %v497 = vld [vmem:[#allocation11 + $0x1c] sm:$0xf]
    %v498 = vld [vmem:[#allocation11 + $0x20] sm:$0xf]
    %v499 = vld [vmem:[#allocation11 + $0x24] sm:$0xf]
    %v500 = vld [vmem:[#allocation11 + $0x28] sm:$0xf]
    %v501 = vld [vmem:[#allocation11 + $0x2c] sm:$0xf]
    %v502 = vld [vmem:[#allocation11 + $0x30] sm:$0xf]
    %v503 = vld [vmem:[#allocation11 + $0x34] sm:$0xf]
    %v504 = vld [vmem:[#allocation11 + $0x38] sm:$0xf]
    %v505 = vld [vmem:[#allocation11 + $0x3c] sm:$0xf]
    %v522 = vunpack.c.l.b16 %v490
    %v523 = vunpack.c.l.b16 %v491
    %v524 = vunpack.c.l.b16 %v492
    %v525 = vunpack.c.l.b16 %v493
    %v526 = vunpack.c.l.b16 %v494
    %v527 = vunpack.c.l.b16 %v495
    %v528 = vunpack.c.l.b16 %v496
    %v529 = vunpack.c.l.b16 %v497
    %v530 = vunpack.c.l.b16 %v498
    %v531 = vunpack.c.l.b16 %v499
    %v532 = vunpack.c.l.b16 %v500
    %v533 = vunpack.c.l.b16 %v501
    %v534 = vunpack.c.l.b16 %v502
    %v535 = vunpack.c.l.b16 %v503
    %v536 = vunpack.c.l.b16 %v504
    %v537 = vunpack.c.l.b16 %v505
    %v538 = vpack.c.b16 %v523, %v522
    %v539 = vpack.c.b16 %v525, %v524
    %v540 = vpack.c.b16 %v527, %v526
    %v541 = vpack.c.b16 %v529, %v528
    %v542 = vpack.c.b16 %v531, %v530
    %v543 = vpack.c.b16 %v533, %v532
    %v544 = vpack.c.b16 %v535, %v534
    %v545 = vpack.c.b16 %v537, %v536
    %554 = vmatpush.bf16.msra.mxu0 %v545
    %555 = vmatpush.bf16.msra.mxu0 %v544
    %556 = vmatpush.bf16.msra.mxu0 %v543
    %557 = vmatpush.bf16.msra.mxu0 %v542
    %558 = vmatpush.bf16.msra.mxu0 %v541
    %559 = vmatpush.bf16.msra.mxu0 %v540
    %560 = vmatpush.bf16.msra.mxu0 %v539
    %561 = vmatpush.bf16.msra.mxu0 %v538
    %562 = vmatmul.bf16.gmra.mxu0 %v489
    %v563 = vpop.f32.mrf.mxu0
    %v564 = vadd.f32 0.0, %v563
    %v565 = vpop.f32.mrf.mxu0
    %v566 = vadd.f32 0.0, %v565
    %567 = vdwg.mxu0
    %v568 = vmul.f32 %v564, 0.5
    %v569 = vmul.f32 %v566, 0.5
    %v570 = vmul.f32 %v564, 0.044715
    %v571 = vmul.f32 %v566, 0.044715
    %v572 = vmul.f32 %v570, %v564
    %v573 = vmul.f32 %v571, %v566
    %v574 = vmul.f32 %v572, %v564
    %v575 = vmul.f32 %v573, %v566
    %v576 = vadd.f32 %v564, %v574
    %v577 = vadd.f32 %v566, %v575
    %v578 = vmul.f32 %v576, 0.7978846
    %v579 = vmul.f32 %v577, 0.7978846
    %v580 = vtanh.pop %v578
    %v581 = vtanh.pop %v579
    %v582 = vadd.f32 %v580, 1.0
    %v583 = vadd.f32 %v581, 1.0
    %v584 = vmul.f32 %v568, %v582
    %v585 = vmul.f32 %v569, %v583
    %v586 = vpack.c.bf16 %v585, %v584
    %v587 = vld [vmem:[#allocation13] sm:$0xf]
    %v588 = vld [vmem:[#allocation13 + $0x4] sm:$0xf]
    %v589 = vld [vmem:[#allocation13 + $0x8] sm:$0xf]
    %v590 = vld [vmem:[#allocation13 + $0xc] sm:$0xf]
    %v591 = vld [vmem:[#allocation13 + $0x10] sm:$0xf]
    %v592 = vld [vmem:[#allocation13 + $0x14] sm:$0xf]
    %v593 = vld [vmem:[#allocation13 + $0x18] sm:$0xf]
    %v594 = vld [vmem:[#allocation13 + $0x1c] sm:$0xf]
    %v595 = vld [vmem:[#allocation13 + $0x20] sm:$0xf]
    %v596 = vld [vmem:[#allocation13 + $0x24] sm:$0xf]
    %v597 = vld [vmem:[#allocation13 + $0x28] sm:$0xf]
    %v598 = vld [vmem:[#allocation13 + $0x2c] sm:$0xf]
    %v599 = vld [vmem:[#allocation13 + $0x30] sm:$0xf]
    %v600 = vld [vmem:[#allocation13 + $0x34] sm:$0xf]
    %v601 = vld [vmem:[#allocation13 + $0x38] sm:$0xf]
    %v602 = vld [vmem:[#allocation13 + $0x3c] sm:$0xf]
    %v619 = vunpack.c.l.b16 %v587
    %v620 = vunpack.c.l.b16 %v588
    %v621 = vunpack.c.l.b16 %v589
    %v622 = vunpack.c.l.b16 %v590
    %v623 = vunpack.c.l.b16 %v591
    %v624 = vunpack.c.l.b16 %v592
    %v625 = vunpack.c.l.b16 %v593
    %v626 = vunpack.c.l.b16 %v594
    %v627 = vunpack.c.l.b16 %v595
    %v628 = vunpack.c.l.b16 %v596
    %v629 = vunpack.c.l.b16 %v597
    %v630 = vunpack.c.l.b16 %v598
    %v631 = vunpack.c.l.b16 %v599
    %v632 = vunpack.c.l.b16 %v600
    %v633 = vunpack.c.l.b16 %v601
    %v634 = vunpack.c.l.b16 %v602
    %v635 = vpack.c.b16 %v620, %v619
    %v636 = vpack.c.b16 %v622, %v621
    %v637 = vpack.c.b16 %v624, %v623
    %v638 = vpack.c.b16 %v626, %v625
    %v639 = vpack.c.b16 %v628, %v627
    %v640 = vpack.c.b16 %v630, %v629
    %v641 = vpack.c.b16 %v632, %v631
    %v642 = vpack.c.b16 %v634, %v633
    %651 = vmatpush.bf16.msra.mxu0 %v642
    %652 = vmatpush.bf16.msra.mxu0 %v641
    %653 = vmatpush.bf16.msra.mxu0 %v640
    %654 = vmatpush.bf16.msra.mxu0 %v639
    %655 = vmatpush.bf16.msra.mxu0 %v638
    %656 = vmatpush.bf16.msra.mxu0 %v637
    %657 = vmatpush.bf16.msra.mxu0 %v636
    %658 = vmatpush.bf16.msra.mxu0 %v635
    %659 = vmatmul.bf16.gmra.mxu0 %v586
    %v660 = vpop.f32.mrf.mxu0
    %v661 = vadd.f32 0.0, %v660
    %v662 = vpop.f32.mrf.mxu0
    %v663 = vadd.f32 0.0, %v662
    %664 = vdwg.mxu0
    %v665 = vmul.f32 %v661, 0.5
    %v666 = vmul.f32 %v663, 0.5
    %v667 = vmul.f32 %v661, 0.044715
    %v668 = vmul.f32 %v663, 0.044715
    %v669 = vmul.f32 %v667, %v661
    %v670 = vmul.f32 %v668, %v663
    %v671 = vmul.f32 %v669, %v661
    %v672 = vmul.f32 %v670, %v663
    %v673 = vadd.f32 %v661, %v671
    %v674 = vadd.f32 %v663, %v672
    %v675 = vmul.f32 %v673, 0.7978846
    %v676 = vmul.f32 %v674, 0.7978846
    %v677 = vtanh.pop %v675
    %v678 = vtanh.pop %v676
    %v679 = vadd.f32 %v677, 1.0
    %v680 = vadd.f32 %v678, 1.0
    %v681 = vmul.f32 %v665, %v679
    %v682 = vmul.f32 %v666, %v680
    %683 = vst [vmem:[#allocation14] sm:$0xff] %v681
    %684 = vst [vmem:[#allocation14 + $0x8] sm:$0xff] %v682
    %685 = vst [vmem:[#allocation15] sm:$0xff] %v459
    %686 = vst [vmem:[#allocation15 + $0x8] sm:$0xff] %v461
    %687 = vst [vmem:[#allocation17] sm:$0xff] %v473
    %688 = vst [vmem:[#allocation17 + $0x8] sm:$0xff] %v475
    %689 = vst [vmem:[#allocation18] sm:$0xff] %v487
    %690 = vst [vmem:[#allocation18 + $0x8] sm:$0xff] %v488
    // Predicated region
    $region62: #{tpu_custom_call.1} parent=1 // pred_check
      _
    $region63: #{tpu_custom_call.1} parent=1 // pred_check_branch
      %692 = sbr.rel (0) target = $region65
    $region64: #{tpu_custom_call.1} parent=1 // pred_region
      %694 = vsyncadd [#allocation4], 0
      %s695 = sshll.u32 [#allocation14], 4
      %s696 = int_to_ptr.vmem [resolvable:$true] %s695
      %s697 = sshll.u32 %s8, 4
      %s698 = int_to_ptr.hbm [resolvable:$true] %s697
      %703 = dma.vmem_to_hbm [thread:$0]  %s696, 256, %s698, [#allocation4], 128, 128, 8
    $region65: #{tpu_custom_call.1} parent=1 // pred_fallthru
      _
    // Predicated region
    $region66: #{tpu_custom_call.1} parent=1 // pred_check
      _
    $region67: #{tpu_custom_call.1} parent=1 // pred_check_branch
      %705 = sbr.rel (0) target = $region69
    $region68: #{tpu_custom_call.1} parent=1 // pred_region
      %707 = vsyncadd [#allocation16], 0
      %s708 = sshll.u32 [#allocation15], 4
      %s709 = int_to_ptr.vmem [resolvable:$true] %s708
      %s710 = sshll.u32 %s9, 4
      %s711 = int_to_ptr.hbm [resolvable:$true] %s710
      %716 = dma.vmem_to_hbm [thread:$0]  %s709, 256, %s711, [#allocation16], 128, 128, 8
    $region69: #{tpu_custom_call.1} parent=1 // pred_fallthru
      _
    // Predicated region
    $region70: #{tpu_custom_call.1} parent=1 // pred_check
      _
    $region71: #{tpu_custom_call.1} parent=1 // pred_check_branch
      %718 = sbr.rel (0) target = $region73
    $region72: #{tpu_custom_call.1} parent=1 // pred_region
      %720 = vsyncadd [#allocation16], 0
      %s721 = sshll.u32 [#allocation17], 4
      %s722 = int_to_ptr.vmem [resolvable:$true] %s721
      %s723 = sshll.u32 %s10, 4
      %s724 = int_to_ptr.hbm [resolvable:$true] %s723
      %729 = dma.vmem_to_hbm [thread:$0]  %s722, 256, %s724, [#allocation16], 128, 128, 8
    $region73: #{tpu_custom_call.1} parent=1 // pred_fallthru
      _
    // Predicated region
    $region74: #{tpu_custom_call.1} parent=1 // pred_check
      _
    $region75: #{tpu_custom_call.1} parent=1 // pred_check_branch
      %731 = sbr.rel (0) target = $region77
    $region76: #{tpu_custom_call.1} parent=1 // pred_region
      %733 = vsyncadd [#allocation19], 0
      %s734 = sshll.u32 [#allocation18], 4
      %s735 = int_to_ptr.vmem [resolvable:$true] %s734
      %s736 = sshll.u32 %s11, 4
      %s737 = int_to_ptr.hbm [resolvable:$true] %s736
      %742 = dma.vmem_to_hbm [thread:$0]  %s735, 256, %s737, [#allocation19], 128, 128, 8
    $region77: #{tpu_custom_call.1} parent=1 // pred_fallthru
      _
    // Predicated region
    $region78: #{tpu_custom_call.1} parent=1 // pred_check
      _
    $region79: #{tpu_custom_call.1} parent=1 // pred_check_branch
      %744 = sbr.rel (0) target = $region81
    $region80: #{tpu_custom_call.1} parent=1 // pred_region
      %746 = dma.done [#allocation4], 256
    $region81: #{tpu_custom_call.1} parent=1 // pred_fallthru
      _
    // Predicated region
    $region82: #{tpu_custom_call.1} parent=1 // pred_check
      _
    $region83: #{tpu_custom_call.1} parent=1 // pred_check_branch
      %748 = sbr.rel (0) target = $region85
    $region84: #{tpu_custom_call.1} parent=1 // pred_region
      %750 = dma.done [#allocation16], 256
    $region85: #{tpu_custom_call.1} parent=1 // pred_fallthru
      _
    // Predicated region
    $region86: #{tpu_custom_call.1} parent=1 // pred_check
      _
    $region87: #{tpu_custom_call.1} parent=1 // pred_check_branch
      %752 = sbr.rel (0) target = $region89
    $region88: #{tpu_custom_call.1} parent=1 // pred_region
      %754 = dma.done [#allocation16], 256
    $region89: #{tpu_custom_call.1} parent=1 // pred_fallthru
      _
    // Predicated region
    $region90: #{tpu_custom_call.1} parent=1 // pred_check
      _
    $region91: #{tpu_custom_call.1} parent=1 // pred_check_branch
      %756 = sbr.rel (0) target = $region93
    $region92: #{tpu_custom_call.1} parent=1 // pred_region
      %758 = dma.done [#allocation19], 256
    $region93: #{tpu_custom_call.1} parent=1 // pred_fallthru
      _
    %759 = vsyncpa [#allocation3], 1
    %760 = vsyncpa [#allocation6], 1
    %761 = vsyncpa [#allocation9], 1
    %762 = vsyncpa [#allocation12], 1
    %763 = vsyncpa [#allocation4], 1
    %764 = vsyncpa [#allocation16], 1
    %765 = vsyncpa [#allocation19], 1

// kernel: tpu_custom_call.1
$region0: #{tpu_custom_call.1}
  #allocation0 [shape = 'u32[]', space=smem, size = 0x4, offset = 0x4, fixed_abs, tag = 'smem constant byte address 0x4 - core index']
  #allocation1 [shape = 'u32[72,128]{1,0:T(1,128)}', space=vmem, size = 0x9000, scoped, tag = 'internal scratch']
  %s0 = inlined_call_operand.hbm [shape: bf16[16,128], index: 0, kind: input, shape index: {}]
  %s1 = inlined_call_operand.hbm [shape: bf16[128,128], index: 1, kind: input, shape index: {}]
  %s2 = inlined_call_operand.hbm [shape: bf16[128,128], index: 2, kind: input, shape index: {}]
  %s3 = inlined_call_operand.hbm [shape: bf16[128,256], index: 3, kind: input, shape index: {}]
  %s4 = inlined_call_operand.vmem [shape: f32[1,256], index: 4, kind: input, shape index: {}]
  %s5 = inlined_call_operand.hbm [shape: f32[16,128], index: 5, kind: input, shape index: {}]
  %s6 = inlined_call_operand.hbm [shape: bf16[128,128], index: 6, kind: input, shape index: {}]
  %s7 = inlined_call_operand.hbm [shape: bf16[128,128], index: 7, kind: input, shape index: {}]
  %s8 = inlined_call_operand.hbm [shape: f32[16,128], index: 8, kind: output, shape index: {0}]
  %s9 = inlined_call_operand.hbm [shape: f32[16,128], index: 9, kind: output, shape index: {1}]
  %s10 = inlined_call_operand.hbm [shape: f32[16,128], index: 10, kind: output, shape index: {2}]
  %s11 = inlined_call_operand.hbm [shape: f32[16,128], index: 11, kind: output, shape index: {3}]
  %12 = xla_tuple %s8, %s9, %s10, %s11
  %s13 = sld [smem:[#allocation0]]
  $region94: #{tpu_custom_call.1} parent=0
    _
  %s15 = ssub.s32 1, %s13
  %s16 = scalar_select 0, %s15, %s13
  $region1: #{tpu_custom_call.1} parent=0
    #allocation2 [shape = 'u8[4096]{0}', space=vmem, size = 0x1000, scoped, tag = 'input window, operand 0, single buffered']
    #allocation3 [shape = 's32[1]{0}', space=sflag, size = 0x4, scoped, tag = 'scoped memory for tpu_custom_call.1']
    #allocation4 [shape = 's32[1]{0}', space=sflag, size = 0x4, scoped, tag = 'scoped memory for tpu_custom_call.1']
    #allocation5 [shape = 'u8[32768]{0}', space=vmem, size = 0x8000, scoped, tag = 'input window, operand 1, single buffered']
    #allocation6 [shape = 's32[1]{0}', space=sflag, size = 0x4, scoped, tag = 'scoped memory for tpu_custom_call.1']
    #allocation7 [shape = 'u8[32768]{0}', space=vmem, size = 0x8000, scoped, tag = 'input window, operand 2, single buffered']
    #allocation8 [shape = 'u8[65536]{0}', space=vmem, size = 0x10000, scoped, tag = 'input window, operand 3, single buffered']
    #allocation9 [shape = 's32[1]{0}', space=sflag, size = 0x4, scoped, tag = 'scoped memory for tpu_custom_call.1']
    #allocation10 [shape = 'u8[8192]{0}', space=vmem, size = 0x2000, scoped, tag = 'input window, operand 5, single buffered']
    #allocation11 [shape = 'u8[32768]{0}', space=vmem, size = 0x8000, scoped, tag = 'input window, operand 6, single buffered']
    #allocation12 [shape = 's32[1]{0}', space=sflag, size = 0x4, scoped, tag = 'scoped memory for tpu_custom_call.1']
    #allocation13 [shape = 'u8[32768]{0}', space=vmem, size = 0x8000, scoped, tag = 'input window, operand 7, single buffered']
    #allocation14 [shape = 'u8[8192]{0}', space=vmem, size = 0x2000, scoped, tag = 'output window, operand 0, single buffered']
    #allocation15 [shape = 'u8[8192]{0}', space=vmem, size = 0x2000, scoped, tag = 'output window, operand 1, single buffered']
    #allocation16 [shape = 's32[1]{0}', space=sflag, size = 0x4, scoped, tag = 'scoped memory for tpu_custom_call.1']
    #allocation17 [shape = 'u8[8192]{0}', space=vmem, size = 0x2000, scoped, tag = 'output window, operand 2, single buffered']
    #allocation18 [shape = 'u8[8192]{0}', space=vmem, size = 0x2000, scoped, tag = 'output window, operand 3, single buffered']
    #allocation19 [shape = 's32[1]{0}', space=sflag, size = 0x4, scoped, tag = 'scoped memory for tpu_custom_call.1']
    %17 = vsyncpa [#allocation3], 0
    %18 = vsyncpa [#allocation6], 0
    %19 = vsyncpa [#allocation9], 0
    %20 = vsyncpa [#allocation12], 0
    %21 = vsyncpa [#allocation4], 0
    %22 = vsyncpa [#allocation16], 0
    %23 = vsyncpa [#allocation19], 0
    // Predicated region
    $region2: #{tpu_custom_call.1} parent=1 // pred_check
      _
    $region3: #{tpu_custom_call.1} parent=1 // pred_check_branch
      %25 = sbr.rel (0) target = $region5
    $region4: #{tpu_custom_call.1} parent=1 // pred_region
      %27 = vsyncadd [#allocation3], 0
      %s28 = sshll.u32 %s0, 4
      %s29 = int_to_ptr.hbm [resolvable:$true] %s28
      %s30 = sshll.u32 [#allocation2], 4
      %s31 = int_to_ptr.vmem [resolvable:$true] %s30
      %36 = dma.hbm_to_vmem [thread:$0]  %s29, 128, %s31, [#allocation3], 64, 64, 4
    $region5: #{tpu_custom_call.1} parent=1 // pred_fallthru
      _
    // Predicated region
    $region6: #{tpu_custom_call.1} parent=1 // pred_check
      _
    $region7: #{tpu_custom_call.1} parent=1 // pred_check_branch
      %38 = sbr.rel (0) target = $region9
    $region8: #{tpu_custom_call.1} parent=1 // pred_region
      %40 = vsyncadd [#allocation6], 0
      %s41 = sshll.u32 %s1, 4
      %s42 = int_to_ptr.hbm [resolvable:$true] %s41
      %s43 = sshll.u32 [#allocation5], 4
      %s44 = int_to_ptr.vmem [resolvable:$true] %s43
      %49 = dma.hbm_to_vmem [thread:$0]  %s42, 1024, %s44, [#allocation6], 64, 64, 4
    $region9: #{tpu_custom_call.1} parent=1 // pred_fallthru
      _
    // Predicated region
    $region10: #{tpu_custom_call.1} parent=1 // pred_check
      _
    $region11: #{tpu_custom_call.1} parent=1 // pred_check_branch
      %51 = sbr.rel (0) target = $region13
    $region12: #{tpu_custom_call.1} parent=1 // pred_region
      %53 = vsyncadd [#allocation6], 0
      %s54 = sshll.u32 %s2, 4
      %s55 = int_to_ptr.hbm [resolvable:$true] %s54
      %s56 = sshll.u32 [#allocation7], 4
      %s57 = int_to_ptr.vmem [resolvable:$true] %s56
      %62 = dma.hbm_to_vmem [thread:$0]  %s55, 1024, %s57, [#allocation6], 64, 64, 4
    $region13: #{tpu_custom_call.1} parent=1 // pred_fallthru
      _
    // Predicated region
    $region14: #{tpu_custom_call.1} parent=1 // pred_check
      _
    $region15: #{tpu_custom_call.1} parent=1 // pred_check_branch
      %64 = sbr.rel (0) target = $region17
    $region16: #{tpu_custom_call.1} parent=1 // pred_region
      %66 = vsyncadd [#allocation9], 0
      %s67 = sshll.u32 %s3, 4
      %s68 = int_to_ptr.hbm [resolvable:$true] %s67
      %s69 = sshll.u32 [#allocation8], 4
      %s70 = int_to_ptr.vmem [resolvable:$true] %s69
      %75 = dma.hbm_to_vmem [thread:$0]  %s68, 2048, %s70, [#allocation9], 128, 128, 8
    $region17: #{tpu_custom_call.1} parent=1 // pred_fallthru
      _
    // Predicated region
    $region18: #{tpu_custom_call.1} parent=1 // pred_check
      _
    $region19: #{tpu_custom_call.1} parent=1 // pred_check_branch
      %77 = sbr.rel (0) target = $region21
    $region20: #{tpu_custom_call.1} parent=1 // pred_region
      _
    $region21: #{tpu_custom_call.1} parent=1 // pred_fallthru
      _
    // Predicated region
    $region22: #{tpu_custom_call.1} parent=1 // pred_check
      _
    $region23: #{tpu_custom_call.1} parent=1 // pred_check_branch
      %79 = sbr.rel (0) target = $region25
    $region24: #{tpu_custom_call.1} parent=1 // pred_region
      %81 = vsyncadd [#allocation9], 0
      %s82 = sshll.u32 %s5, 4
      %s83 = int_to_ptr.hbm [resolvable:$true] %s82
      %s84 = sshll.u32 [#allocation10], 4
      %s85 = int_to_ptr.vmem [resolvable:$true] %s84
      %90 = dma.hbm_to_vmem [thread:$0]  %s83, 256, %s85, [#allocation9], 128, 128, 8
    $region25: #{tpu_custom_call.1} parent=1 // pred_fallthru
      _
    // Predicated region
    $region26: #{tpu_custom_call.1} parent=1 // pred_check
      _
    $region27: #{tpu_custom_call.1} parent=1 // pred_check_branch
      %92 = sbr.rel (0) target = $region29
    $region28: #{tpu_custom_call.1} parent=1 // pred_region
      %94 = vsyncadd [#allocation12], 0
      %s95 = sshll.u32 %s6, 4
      %s96 = int_to_ptr.hbm [resolvable:$true] %s95
      %s97 = sshll.u32 [#allocation11], 4
      %s98 = int_to_ptr.vmem [resolvable:$true] %s97
      %103 = dma.hbm_to_vmem [thread:$0]  %s96, 1024, %s98, [#allocation12], 64, 64, 4
    $region29: #{tpu_custom_call.1} parent=1 // pred_fallthru
      _
    // Predicated region
    $region30: #{tpu_custom_call.1} parent=1 // pred_check
      _
    $region31: #{tpu_custom_call.1} parent=1 // pred_check_branch
      %105 = sbr.rel (0) target = $region33
    $region32: #{tpu_custom_call.1} parent=1 // pred_region
      %107 = vsyncadd [#allocation12], 0
      %s108 = sshll.u32 %s7, 4
      %s109 = int_to_ptr.hbm [resolvable:$true] %s108
      %s110 = sshll.u32 [#allocation13], 4
      %s111 = int_to_ptr.vmem [resolvable:$true] %s110
      %116 = dma.hbm_to_vmem [thread:$0]  %s109, 1024, %s111, [#allocation12], 64, 64, 4
    $region33: #{tpu_custom_call.1} parent=1 // pred_fallthru
      _
    // Predicated region
    $region34: #{tpu_custom_call.1} parent=1 // pred_check
      _
    $region35: #{tpu_custom_call.1} parent=1 // pred_check_branch
      %118 = sbr.rel (0) target = $region37
    $region36: #{tpu_custom_call.1} parent=1 // pred_region
      %120 = dma.done [#allocation3], 128
    $region37: #{tpu_custom_call.1} parent=1 // pred_fallthru
      _
    // Predicated region
    $region38: #{tpu_custom_call.1} parent=1 // pred_check
      _
    $region39: #{tpu_custom_call.1} parent=1 // pred_check_branch
      %122 = sbr.rel (0) target = $region41
    $region40: #{tpu_custom_call.1} parent=1 // pred_region
      %124 = dma.done [#allocation6], 1024
    $region41: #{tpu_custom_call.1} parent=1 // pred_fallthru
      _
    // Predicated region
    $region42: #{tpu_custom_call.1} parent=1 // pred_check
      _
    $region43: #{tpu_custom_call.1} parent=1 // pred_check_branch
      %126 = sbr.rel (0) target = $region45
    $region44: #{tpu_custom_call.1} parent=1 // pred_region
      %128 = dma.done [#allocation6], 1024
    $region45: #{tpu_custom_call.1} parent=1 // pred_fallthru
      _
    // Predicated region
    $region46: #{tpu_custom_call.1} parent=1 // pred_check
      _
    $region47: #{tpu_custom_call.1} parent=1 // pred_check_branch
      %130 = sbr.rel (0) target = $region49
    $region48: #{tpu_custom_call.1} parent=1 // pred_region
      %132 = dma.done [#allocation9], 2048
    $region49: #{tpu_custom_call.1} parent=1 // pred_fallthru
      _
    // Predicated region
    $region50: #{tpu_custom_call.1} parent=1 // pred_check
      _
    $region51: #{tpu_custom_call.1} parent=1 // pred_check_branch
      %134 = sbr.rel (0) target = $region53
    $region52: #{tpu_custom_call.1} parent=1 // pred_region
      %136 = dma.done [#allocation9], 256
    $region53: #{tpu_custom_call.1} parent=1 // pred_fallthru
      _
    // Predicated region
    $region54: #{tpu_custom_call.1} parent=1 // pred_check
      _
    $region55: #{tpu_custom_call.1} parent=1 // pred_check_branch
      %138 = sbr.rel (0) target = $region57
    $region56: #{tpu_custom_call.1} parent=1 // pred_region
      %140 = dma.done [#allocation12], 1024
    $region57: #{tpu_custom_call.1} parent=1 // pred_fallthru
      _
    // Predicated region
    $region58: #{tpu_custom_call.1} parent=1 // pred_check
      _
    $region59: #{tpu_custom_call.1} parent=1 // pred_check_branch
      %142 = sbr.rel (0) target = $region61
    $region60: #{tpu_custom_call.1} parent=1 // pred_region
      %144 = dma.done [#allocation12], 1024
    $region61: #{tpu_custom_call.1} parent=1 // pred_fallthru
      _
    %v145 = vld [vmem:[#allocation2] sm:$0xf]
    %v146 = vld [vmem:[#allocation2 + $0x4] sm:$0xf]
    %v147 = vld [vmem:[#allocation5] sm:$0xf]
    %v148 = vld [vmem:[#allocation5 + $0x4] sm:$0xf]
    %v149 = vld [vmem:[#allocation5 + $0x8] sm:$0xf]
    %v150 = vld [vmem:[#allocation5 + $0xc] sm:$0xf]
    %v151 = vld [vmem:[#allocation5 + $0x10] sm:$0xf]
    %v152 = vld [vmem:[#allocation5 + $0x14] sm:$0xf]
    %v153 = vld [vmem:[#allocation5 + $0x18] sm:$0xf]
    %v154 = vld [vmem:[#allocation5 + $0x1c] sm:$0xf]
    %v155 = vld [vmem:[#allocation5 + $0x20] sm:$0xf]
    %v156 = vld [vmem:[#allocation5 + $0x24] sm:$0xf]
    %v157 = vld [vmem:[#allocation5 + $0x28] sm:$0xf]
    %v158 = vld [vmem:[#allocation5 + $0x2c] sm:$0xf]
    %v159 = vld [vmem:[#allocation5 + $0x30] sm:$0xf]
    %v160 = vld [vmem:[#allocation5 + $0x34] sm:$0xf]
    %v161 = vld [vmem:[#allocation5 + $0x38] sm:$0xf]
    %v162 = vld [vmem:[#allocation5 + $0x3c] sm:$0xf]
    %v165 = vunpack.c.l.b16 %v145
    %v166 = vunpack.c.l.b16 %v146
    %v167 = vpack.c.b16 %v166, %v165
    %v185 = vunpack.c.l.b16 %v147
    %v186 = vunpack.c.l.b16 %v148
    %v187 = vunpack.c.l.b16 %v149
    %v188 = vunpack.c.l.b16 %v150
    %v189 = vunpack.c.l.b16 %v151
    %v190 = vunpack.c.l.b16 %v152
    %v191 = vunpack.c.l.b16 %v153
    %v192 = vunpack.c.l.b16 %v154
    %v193 = vunpack.c.l.b16 %v155
    %v194 = vunpack.c.l.b16 %v156
    %v195 = vunpack.c.l.b16 %v157
    %v196 = vunpack.c.l.b16 %v158
    %v197 = vunpack.c.l.b16 %v159
    %v198 = vunpack.c.l.b16 %v160
    %v199 = vunpack.c.l.b16 %v161
    %v200 = vunpack.c.l.b16 %v162
    %v201 = vpack.c.b16 %v186, %v185
    %v202 = vpack.c.b16 %v188, %v187
    %v203 = vpack.c.b16 %v190, %v189
    %v204 = vpack.c.b16 %v192, %v191
    %v205 = vpack.c.b16 %v194, %v193
    %v206 = vpack.c.b16 %v196, %v195
    %v207 = vpack.c.b16 %v198, %v197
    %v208 = vpack.c.b16 %v200, %v199
    %217 = vmatpush.bf16.msra.mxu0 %v208
    %218 = vmatpush.bf16.msra.mxu0 %v207
    %219 = vmatpush.bf16.msra.mxu0 %v206
    %220 = vmatpush.bf16.msra.mxu0 %v205
    %221 = vmatpush.bf16.msra.mxu0 %v204
    %222 = vmatpush.bf16.msra.mxu0 %v203
    %223 = vmatpush.bf16.msra.mxu0 %v202
    %224 = vmatpush.bf16.msra.mxu0 %v201
    %225 = vmatmul.bf16.gmra.mxu0 %v167
    %v226 = vpop.f32.mrf.mxu0
    %v227 = vadd.f32 0.0, %v226
    %v228 = vpop.f32.mrf.mxu0
    %v229 = vadd.f32 0.0, %v228
    %230 = vdwg.mxu0
    %v231 = vmul.f32 %v227, 0.5
    %v232 = vmul.f32 %v229, 0.5
    %v233 = vmul.f32 %v227, 0.044715
    %v234 = vmul.f32 %v229, 0.044715
    %v235 = vmul.f32 %v233, %v227
    %v236 = vmul.f32 %v234, %v229
    %v237 = vmul.f32 %v235, %v227
    %v238 = vmul.f32 %v236, %v229
    %v239 = vadd.f32 %v227, %v237
    %v240 = vadd.f32 %v229, %v238
    %v241 = vmul.f32 %v239, 0.7978846
    %v242 = vmul.f32 %v240, 0.7978846
    %v243 = vtanh.pop %v241
    %v244 = vtanh.pop %v242
    %v245 = vadd.f32 %v243, 1.0
    %v246 = vadd.f32 %v244, 1.0
    %v247 = vmul.f32 %v231, %v245
    %v248 = vmul.f32 %v232, %v246
    %v249 = vpack.c.bf16 %v248, %v247
    %v250 = vld [vmem:[#allocation7] sm:$0xf]
    %v251 = vld [vmem:[#allocation7 + $0x4] sm:$0xf]
    %v252 = vld [vmem:[#allocation7 + $0x8] sm:$0xf]
    %v253 = vld [vmem:[#allocation7 + $0xc] sm:$0xf]
    %v254 = vld [vmem:[#allocation7 + $0x10] sm:$0xf]
    %v255 = vld [vmem:[#allocation7 + $0x14] sm:$0xf]
    %v256 = vld [vmem:[#allocation7 + $0x18] sm:$0xf]
    %v257 = vld [vmem:[#allocation7 + $0x1c] sm:$0xf]
    %v258 = vld [vmem:[#allocation7 + $0x20] sm:$0xf]
    %v259 = vld [vmem:[#allocation7 + $0x24] sm:$0xf]
    %v260 = vld [vmem:[#allocation7 + $0x28] sm:$0xf]
    %v261 = vld [vmem:[#allocation7 + $0x2c] sm:$0xf]
    %v262 = vld [vmem:[#allocation7 + $0x30] sm:$0xf]
    %v263 = vld [vmem:[#allocation7 + $0x34] sm:$0xf]
    %v264 = vld [vmem:[#allocation7 + $0x38] sm:$0xf]
    %v265 = vld [vmem:[#allocation7 + $0x3c] sm:$0xf]
    %v282 = vunpack.c.l.b16 %v250
    %v283 = vunpack.c.l.b16 %v251
    %v284 = vunpack.c.l.b16 %v252
    %v285 = vunpack.c.l.b16 %v253
    %v286 = vunpack.c.l.b16 %v254
    %v287 = vunpack.c.l.b16 %v255
    %v288 = vunpack.c.l.b16 %v256
    %v289 = vunpack.c.l.b16 %v257
    %v290 = vunpack.c.l.b16 %v258
    %v291 = vunpack.c.l.b16 %v259
    %v292 = vunpack.c.l.b16 %v260
    %v293 = vunpack.c.l.b16 %v261
    %v294 = vunpack.c.l.b16 %v262
    %v295 = vunpack.c.l.b16 %v263
    %v296 = vunpack.c.l.b16 %v264
    %v297 = vunpack.c.l.b16 %v265
    %v298 = vpack.c.b16 %v283, %v282
    %v299 = vpack.c.b16 %v285, %v284
    %v300 = vpack.c.b16 %v287, %v286
    %v301 = vpack.c.b16 %v289, %v288
    %v302 = vpack.c.b16 %v291, %v290
    %v303 = vpack.c.b16 %v293, %v292
    %v304 = vpack.c.b16 %v295, %v294
    %v305 = vpack.c.b16 %v297, %v296
    %314 = vmatpush.bf16.msra.mxu0 %v305
    %315 = vmatpush.bf16.msra.mxu0 %v304
    %316 = vmatpush.bf16.msra.mxu0 %v303
    %317 = vmatpush.bf16.msra.mxu0 %v302
    %318 = vmatpush.bf16.msra.mxu0 %v301
    %319 = vmatpush.bf16.msra.mxu0 %v300
    %320 = vmatpush.bf16.msra.mxu0 %v299
    %321 = vmatpush.bf16.msra.mxu0 %v298
    %322 = vmatmul.bf16.gmra.mxu0 %v249
    %v323 = vpop.f32.mrf.mxu0
    %v324 = vadd.f32 0.0, %v323
    %v325 = vpop.f32.mrf.mxu0
    %v326 = vadd.f32 0.0, %v325
    %327 = vdwg.mxu0
    %v328 = vmul.f32 %v324, 0.5
    %v329 = vmul.f32 %v326, 0.5
    %v330 = vmul.f32 %v324, 0.044715
    %v331 = vmul.f32 %v326, 0.044715
    %v332 = vmul.f32 %v330, %v324
    %v333 = vmul.f32 %v331, %v326
    %v334 = vmul.f32 %v332, %v324
    %v335 = vmul.f32 %v333, %v326
    %v336 = vadd.f32 %v324, %v334
    %v337 = vadd.f32 %v326, %v335
    %v338 = vmul.f32 %v336, 0.7978846
    %v339 = vmul.f32 %v337, 0.7978846
    %v340 = vtanh.pop %v338
    %v341 = vtanh.pop %v339
    %v342 = vadd.f32 %v340, 1.0
    %v343 = vadd.f32 %v341, 1.0
    %v344 = vmul.f32 %v328, %v342
    %v345 = vmul.f32 %v329, %v343
    %v346 = vpack.c.bf16 %v345, %v344
    %v347 = vld [vmem:[#allocation8] sm:$0xff]
    %v348 = vld [vmem:[#allocation8 + $0x8] sm:$0xff]
    %v349 = vld [vmem:[#allocation8 + $0x10] sm:$0xff]
    %v350 = vld [vmem:[#allocation8 + $0x18] sm:$0xff]
    %v351 = vld [vmem:[#allocation8 + $0x20] sm:$0xff]
    %v352 = vld [vmem:[#allocation8 + $0x28] sm:$0xff]
    %v353 = vld [vmem:[#allocation8 + $0x30] sm:$0xff]
    %v354 = vld [vmem:[#allocation8 + $0x38] sm:$0xff]
    %v355 = vld [vmem:[#allocation8 + $0x40] sm:$0xff]
    %v356 = vld [vmem:[#allocation8 + $0x48] sm:$0xff]
    %v357 = vld [vmem:[#allocation8 + $0x50] sm:$0xff]
    %v358 = vld [vmem:[#allocation8 + $0x58] sm:$0xff]
    %v359 = vld [vmem:[#allocation8 + $0x60] sm:$0xff]
    %v360 = vld [vmem:[#allocation8 + $0x68] sm:$0xff]
    %v361 = vld [vmem:[#allocation8 + $0x70] sm:$0xff]
    %v362 = vld [vmem:[#allocation8 + $0x78] sm:$0xff]
    %v363 = vld [vmem:[%s4] sm:$0x3]
    %v365 = vperm.slane %v363, 0
    %v366 = vperm.slane %v363, 1
    %v385 = vunpack.c.l.b16 %v347
    %v386 = vunpack.c.h.b16 %v347
    %v387 = vunpack.c.l.b16 %v348
    %v388 = vunpack.c.h.b16 %v348
    %v389 = vunpack.c.l.b16 %v349
    %v390 = vunpack.c.h.b16 %v349
    %v391 = vunpack.c.l.b16 %v350
    %v392 = vunpack.c.h.b16 %v350
    %v393 = vunpack.c.l.b16 %v351
    %v394 = vunpack.c.h.b16 %v351
    %v395 = vunpack.c.l.b16 %v352
    %v396 = vunpack.c.h.b16 %v352
    %v397 = vunpack.c.l.b16 %v353
    %v398 = vunpack.c.h.b16 %v353
    %v399 = vunpack.c.l.b16 %v354
    %v400 = vunpack.c.h.b16 %v354
    %v401 = vunpack.c.l.b16 %v355
    %v402 = vunpack.c.h.b16 %v355
    %v403 = vunpack.c.l.b16 %v356
    %v404 = vunpack.c.h.b16 %v356
    %v405 = vunpack.c.l.b16 %v357
    %v406 = vunpack.c.h.b16 %v357
    %v407 = vunpack.c.l.b16 %v358
    %v408 = vunpack.c.h.b16 %v358
    %v409 = vunpack.c.l.b16 %v359
    %v410 = vunpack.c.h.b16 %v359
    %v411 = vunpack.c.l.b16 %v360
    %v412 = vunpack.c.h.b16 %v360
    %v413 = vunpack.c.l.b16 %v361
    %v414 = vunpack.c.h.b16 %v361
    %v415 = vunpack.c.l.b16 %v362
    %v416 = vunpack.c.h.b16 %v362
    %v417 = vpack.c.b16 %v387, %v385
    %v418 = vpack.c.b16 %v388, %v386
    %v419 = vpack.c.b16 %v391, %v389
    %v420 = vpack.c.b16 %v392, %v390
    %v421 = vpack.c.b16 %v395, %v393
    %v422 = vpack.c.b16 %v396, %v394
    %v423 = vpack.c.b16 %v399, %v397
    %v424 = vpack.c.b16 %v400, %v398
    %v425 = vpack.c.b16 %v403, %v401
    %v426 = vpack.c.b16 %v404, %v402
    %v427 = vpack.c.b16 %v407, %v405
    %v428 = vpack.c.b16 %v408, %v406
    %v429 = vpack.c.b16 %v411, %v409
    %v430 = vpack.c.b16 %v412, %v410
    %v431 = vpack.c.b16 %v415, %v413
    %v432 = vpack.c.b16 %v416, %v414
    %449 = vmatpush.bf16.msra.mxu0 %v431
    %450 = vmatpush.bf16.msra.mxu0 %v429
    %451 = vmatpush.bf16.msra.mxu0 %v427
    %452 = vmatpush.bf16.msra.mxu0 %v425
    %453 = vmatpush.bf16.msra.mxu0 %v423
    %454 = vmatpush.bf16.msra.mxu0 %v421
    %455 = vmatpush.bf16.msra.mxu0 %v419
    %456 = vmatpush.bf16.msra.mxu0 %v417
    %457 = vmatmul.bf16.gmra.mxu0 %v346
    %v458 = vpop.f32.mrf.mxu0
    %v459 = vadd.f32 %v365, %v458
    %v460 = vpop.f32.mrf.mxu0
    %v461 = vadd.f32 %v365, %v460
    %462 = vdwg.mxu0
    %463 = vmatpush.bf16.msra.mxu0 %v432
    %464 = vmatpush.bf16.msra.mxu0 %v430
    %465 = vmatpush.bf16.msra.mxu0 %v428
    %466 = vmatpush.bf16.msra.mxu0 %v426
    %467 = vmatpush.bf16.msra.mxu0 %v424
    %468 = vmatpush.bf16.msra.mxu0 %v422
    %469 = vmatpush.bf16.msra.mxu0 %v420
    %470 = vmatpush.bf16.msra.mxu0 %v418
    %471 = vmatmul.bf16.gmra.mxu0 %v346
    %v472 = vpop.f32.mrf.mxu0
    %v473 = vadd.f32 %v366, %v472
    %v474 = vpop.f32.mrf.mxu0
    %v475 = vadd.f32 %v366, %v474
    %476 = vdwg.mxu0
    %v477 = vld [vmem:[#allocation10] sm:$0xff]
    %v478 = vld [vmem:[#allocation10 + $0x8] sm:$0xff]
    %v479 = vmul.f32 %v473, 0.5
    %v480 = vmul.f32 %v475, 0.5
    %v481 = vmul.f32 %v479, 1.442695
    %v482 = vpow.pop %v481
    %v483 = vmul.f32 %v480, 1.442695
    %v484 = vpow.pop %v483
    %v485 = vmul.f32 %v477, %v482
    %v486 = vmul.f32 %v478, %v484
    %v487 = vadd.f32 %v459, %v485
    %v488 = vadd.f32 %v461, %v486
    %v489 = vpack.c.bf16 %v488, %v487
    %v490 = vld [vmem:[#allocation11] sm:$0xf]
    %v491 = vld [vmem:[#allocation11 + $0x4] sm:$0xf]
    %v492 = vld [vmem:[#allocation11 + $0x8] sm:$0xf]
    %v493 = vld [vmem:[#allocation11 + $0xc] sm:$0xf]
    %v494 = vld [vmem:[#allocation11 + $0x10] sm:$0xf]
    %v495 = vld [vmem:[#allocation11 + $0x14] sm:$0xf]
    %v496 = vld [vmem:[#allocation11 + $0x18] sm:$0xf]
    %v497 = vld [vmem:[#allocation11 + $0x1c] sm:$0xf]
    %v498 = vld [vmem:[#allocation11 + $0x20] sm:$0xf]
    %v499 = vld [vmem:[#allocation11 + $0x24] sm:$0xf]
    %v500 = vld [vmem:[#allocation11 + $0x28] sm:$0xf]
    %v501 = vld [vmem:[#allocation11 + $0x2c] sm:$0xf]
    %v502 = vld [vmem:[#allocation11 + $0x30] sm:$0xf]
    %v503 = vld [vmem:[#allocation11 + $0x34] sm:$0xf]
    %v504 = vld [vmem:[#allocation11 + $0x38] sm:$0xf]
    %v505 = vld [vmem:[#allocation11 + $0x3c] sm:$0xf]
    %v522 = vunpack.c.l.b16 %v490
    %v523 = vunpack.c.l.b16 %v491
    %v524 = vunpack.c.l.b16 %v492
    %v525 = vunpack.c.l.b16 %v493
    %v526 = vunpack.c.l.b16 %v494
    %v527 = vunpack.c.l.b16 %v495
    %v528 = vunpack.c.l.b16 %v496
    %v529 = vunpack.c.l.b16 %v497
    %v530 = vunpack.c.l.b16 %v498
    %v531 = vunpack.c.l.b16 %v499
    %v532 = vunpack.c.l.b16 %v500
    %v533 = vunpack.c.l.b16 %v501
    %v534 = vunpack.c.l.b16 %v502
    %v535 = vunpack.c.l.b16 %v503
    %v536 = vunpack.c.l.b16 %v504
    %v537 = vunpack.c.l.b16 %v505
    %v538 = vpack.c.b16 %v523, %v522
    %v539 = vpack.c.b16 %v525, %v524
    %v540 = vpack.c.b16 %v527, %v526
    %v541 = vpack.c.b16 %v529, %v528
    %v542 = vpack.c.b16 %v531, %v530
    %v543 = vpack.c.b16 %v533, %v532
    %v544 = vpack.c.b16 %v535, %v534
    %v545 = vpack.c.b16 %v537, %v536
    %554 = vmatpush.bf16.msra.mxu0 %v545
    %555 = vmatpush.bf16.msra.mxu0 %v544
    %556 = vmatpush.bf16.msra.mxu0 %v543
    %557 = vmatpush.bf16.msra.mxu0 %v542
    %558 = vmatpush.bf16.msra.mxu0 %v541
    %559 = vmatpush.bf16.msra.mxu0 %v540
    %560 = vmatpush.bf16.msra.mxu0 %v539
    %561 = vmatpush.bf16.msra.mxu0 %v538
    %562 = vmatmul.bf16.gmra.mxu0 %v489
    %v563 = vpop.f32.mrf.mxu0
    %v564 = vadd.f32 0.0, %v563
    %v565 = vpop.f32.mrf.mxu0
    %v566 = vadd.f32 0.0, %v565
    %567 = vdwg.mxu0
    %v568 = vmul.f32 %v564, 0.5
    %v569 = vmul.f32 %v566, 0.5
    %v570 = vmul.f32 %v564, 0.044715
    %v571 = vmul.f32 %v566, 0.044715
    %v572 = vmul.f32 %v570, %v564
    %v573 = vmul.f32 %v571, %v566
    %v574 = vmul.f32 %v572, %v564
    %v575 = vmul.f32 %v573, %v566
    %v576 = vadd.f32 %v564, %v574
    %v577 = vadd.f32 %v566, %v575
    %v578 = vmul.f32 %v576, 0.7978846
    %v579 = vmul.f32 %v577, 0.7978846
    %v580 = vtanh.pop %v578
    %v581 = vtanh.pop %v579
    %v582 = vadd.f32 %v580, 1.0
    %v583 = vadd.f32 %v581, 1.0
    %v584 = vmul.f32 %v568, %v582
    %v585 = vmul.f32 %v569, %v583
    %v586 = vpack.c.bf16 %v585, %v584
    %v587 = vld [vmem:[#allocation13] sm:$0xf]
    %v588 = vld [vmem:[#allocation13 + $0x4] sm:$0xf]
    %v589 = vld [vmem:[#allocation13 + $0x8] sm:$0xf]
    %v590 = vld [vmem:[#allocation13 + $0xc] sm:$0xf]
    %v591 = vld [vmem:[#allocation13 + $0x10] sm:$0xf]
    %v592 = vld [vmem:[#allocation13 + $0x14] sm:$0xf]
    %v593 = vld [vmem:[#allocation13 + $0x18] sm:$0xf]
    %v594 = vld [vmem:[#allocation13 + $0x1c] sm:$0xf]
    %v595 = vld [vmem:[#allocation13 + $0x20] sm:$0xf]
    %v596 = vld [vmem:[#allocation13 + $0x24] sm:$0xf]
    %v597 = vld [vmem:[#allocation13 + $0x28] sm:$0xf]
    %v598 = vld [vmem:[#allocation13 + $0x2c] sm:$0xf]
    %v599 = vld [vmem:[#allocation13 + $0x30] sm:$0xf]
    %v600 = vld [vmem:[#allocation13 + $0x34] sm:$0xf]
    %v601 = vld [vmem:[#allocation13 + $0x38] sm:$0xf]
    %v602 = vld [vmem:[#allocation13 + $0x3c] sm:$0xf]
    %v619 = vunpack.c.l.b16 %v587
    %v620 = vunpack.c.l.b16 %v588
    %v621 = vunpack.c.l.b16 %v589
    %v622 = vunpack.c.l.b16 %v590
    %v623 = vunpack.c.l.b16 %v591
    %v624 = vunpack.c.l.b16 %v592
    %v625 = vunpack.c.l.b16 %v593
    %v626 = vunpack.c.l.b16 %v594
    %v627 = vunpack.c.l.b16 %v595
    %v628 = vunpack.c.l.b16 %v596
    %v629 = vunpack.c.l.b16 %v597
    %v630 = vunpack.c.l.b16 %v598
    %v631 = vunpack.c.l.b16 %v599
    %v632 = vunpack.c.l.b16 %v600
    %v633 = vunpack.c.l.b16 %v601
    %v634 = vunpack.c.l.b16 %v602
    %v635 = vpack.c.b16 %v620, %v619
    %v636 = vpack.c.b16 %v622, %v621
    %v637 = vpack.c.b16 %v624, %v623
    %v638 = vpack.c.b16 %v626, %v625
    %v639 = vpack.c.b16 %v628, %v627
    %v640 = vpack.c.b16 %v630, %v629
    %v641 = vpack.c.b16 %v632, %v631
    %v642 = vpack.c.b16 %v634, %v633
    %651 = vmatpush.bf16.msra.mxu0 %v642
    %652 = vmatpush.bf16.msra.mxu0 %v641
    %653 = vmatpush.bf16.msra.mxu0 %v640
    %654 = vmatpush.bf16.msra.mxu0 %v639
    %655 = vmatpush.bf16.msra.mxu0 %v638
    %656 = vmatpush.bf16.msra.mxu0 %v637
    %657 = vmatpush.bf16.msra.mxu0 %v636
    %658 = vmatpush.bf16.msra.mxu0 %v635
    %659 = vmatmul.bf16.gmra.mxu0 %v586
    %v660 = vpop.f32.mrf.mxu0
    %v661 = vadd.f32 0.0, %v660
    %v662 = vpop.f32.mrf.mxu0
    %v663 = vadd.f32 0.0, %v662
    %664 = vdwg.mxu0
    %v665 = vmul.f32 %v661, 0.5
    %v666 = vmul.f32 %v663, 0.5
    %v667 = vmul.f32 %v661, 0.044715
    %v668 = vmul.f32 %v663, 0.044715
    %v669 = vmul.f32 %v667, %v661
    %v670 = vmul.f32 %v668, %v663
    %v671 = vmul.f32 %v669, %v661
    %v672 = vmul.f32 %v670, %v663
    %v673 = vadd.f32 %v661, %v671
    %v674 = vadd.f32 %v663, %v672
    %v675 = vmul.f32 %v673, 0.7978846
    %v676 = vmul.f32 %v674, 0.7978846
    %v677 = vtanh.pop %v675
    %v678 = vtanh.pop %v676
    %v679 = vadd.f32 %v677, 1.0
    %v680 = vadd.f32 %v678, 1.0
    %v681 = vmul.f32 %v665, %v679
    %v682 = vmul.f32 %v666, %v680
    %683 = vst [vmem:[#allocation14] sm:$0xff] %v681
    %684 = vst [vmem:[#allocation14 + $0x8] sm:$0xff] %v682
    %685 = vst [vmem:[#allocation15] sm:$0xff] %v459
    %686 = vst [vmem:[#allocation15 + $0x8] sm:$0xff] %v461
    %687 = vst [vmem:[#allocation17] sm:$0xff] %v473
    %688 = vst [vmem:[#allocation17 + $0x8] sm:$0xff] %v475
    %689 = vst [vmem:[#allocation18] sm:$0xff] %v487
    %690 = vst [vmem:[#allocation18 + $0x8] sm:$0xff] %v488
    // Predicated region
    $region62: #{tpu_custom_call.1} parent=1 // pred_check
      _
    $region63: #{tpu_custom_call.1} parent=1 // pred_check_branch
      %692 = sbr.rel (0) target = $region65
    $region64: #{tpu_custom_call.1} parent=1 // pred_region
      %694 = vsyncadd [#allocation4], 0
      %s695 = sshll.u32 [#allocation14], 4
      %s696 = int_to_ptr.vmem [resolvable:$true] %s695
      %s697 = sshll.u32 %s8, 4
      %s698 = int_to_ptr.hbm [resolvable:$true] %s697
      %703 = dma.vmem_to_hbm [thread:$0]  %s696, 256, %s698, [#allocation4], 128, 128, 8
    $region65: #{tpu_custom_call.1} parent=1 // pred_fallthru
      _
    // Predicated region
    $region66: #{tpu_custom_call.1} parent=1 // pred_check
      _
    $region67: #{tpu_custom_call.1} parent=1 // pred_check_branch
      %705 = sbr.rel (0) target = $region69
    $region68: #{tpu_custom_call.1} parent=1 // pred_region
      %707 = vsyncadd [#allocation16], 0
      %s708 = sshll.u32 [#allocation15], 4
      %s709 = int_to_ptr.vmem [resolvable:$true] %s708
      %s710 = sshll.u32 %s9, 4
      %s711 = int_to_ptr.hbm [resolvable:$true] %s710
      %716 = dma.vmem_to_hbm [thread:$0]  %s709, 256, %s711, [#allocation16], 128, 128, 8
    $region69: #{tpu_custom_call.1} parent=1 // pred_fallthru
      _
    // Predicated region
    $region70: #{tpu_custom_call.1} parent=1 // pred_check
      _
    $region71: #{tpu_custom_call.1} parent=1 // pred_check_branch
      %718 = sbr.rel (0) target = $region73
    $region72: #{tpu_custom_call.1} parent=1 // pred_region
      %720 = vsyncadd [#allocation16], 0
      %s721 = sshll.u32 [#allocation17], 4
      %s722 = int_to_ptr.vmem [resolvable:$true] %s721
      %s723 = sshll.u32 %s10, 4
      %s724 = int_to_ptr.hbm [resolvable:$true] %s723
      %729 = dma.vmem_to_hbm [thread:$0]  %s722, 256, %s724, [#allocation16], 128, 128, 8
    $region73: #{tpu_custom_call.1} parent=1 // pred_fallthru
      _
    // Predicated region
    $region74: #{tpu_custom_call.1} parent=1 // pred_check
      _
    $region75: #{tpu_custom_call.1} parent=1 // pred_check_branch
      %731 = sbr.rel (0) target = $region77
    $region76: #{tpu_custom_call.1} parent=1 // pred_region
      %733 = vsyncadd [#allocation19], 0
      %s734 = sshll.u32 [#allocation18], 4
      %s735 = int_to_ptr.vmem [resolvable:$true] %s734
      %s736 = sshll.u32 %s11, 4
      %s737 = int_to_ptr.hbm [resolvable:$true] %s736
      %742 = dma.vmem_to_hbm [thread:$0]  %s735, 256, %s737, [#allocation19], 128, 128, 8
    $region77: #{tpu_custom_call.1} parent=1 // pred_fallthru
      _
    // Predicated region
    $region78: #{tpu_custom_call.1} parent=1 // pred_check
      _
    $region79: #{tpu_custom_call.1} parent=1 // pred_check_branch
      %744 = sbr.rel (0) target = $region81
    $region80: #{tpu_custom_call.1} parent=1 // pred_region
      %746 = dma.done [#allocation4], 256
    $region81: #{tpu_custom_call.1} parent=1 // pred_fallthru
      _
    // Predicated region
    $region82: #{tpu_custom_call.1} parent=1 // pred_check
      _
    $region83: #{tpu_custom_call.1} parent=1 // pred_check_branch
      %748 = sbr.rel (0) target = $region85
    $region84: #{tpu_custom_call.1} parent=1 // pred_region
      %750 = dma.done [#allocation16], 256
    $region85: #{tpu_custom_call.1} parent=1 // pred_fallthru
      _
    // Predicated region
    $region86: #{tpu_custom_call.1} parent=1 // pred_check
      _
    $region87: #{tpu_custom_call.1} parent=1 // pred_check_branch
      %752 = sbr.rel (0) target = $region89
    $region88: #{tpu_custom_call.1} parent=1 // pred_region
      %754 = dma.done [#allocation16], 256
    $region89: #{tpu_custom_call.1} parent=1 // pred_fallthru
      _
    // Predicated region
    $region90: #{tpu_custom_call.1} parent=1 // pred_check
      _
    $region91: #{tpu_custom_call.1} parent=1 // pred_check_branch
      %756 = sbr.rel (0) target = $region93
    $region92: #{tpu_custom_call.1} parent=1 // pred_region
      %758 = dma.done [#allocation19], 256
    $region93: #{tpu_custom_call.1} parent=1 // pred_fallthru
      _
    %759 = vsyncpa [#allocation3], 1
    %760 = vsyncpa [#allocation6], 1
    %761 = vsyncpa [#allocation9], 1
    %762 = vsyncpa [#allocation12], 1
    %763 = vsyncpa [#allocation4], 1
    %764 = vsyncpa [#allocation16], 1
    %765 = vsyncpa [#allocation19], 1

</llo_original>
